<compile_context>
chip_gen: v7x
topology: tpu7x:2x2x1
jax: 0.10.0
libtpu: 0.0.40
codegen_flags: <defaults>
</compile_context>

<pallas_src>
import functools

import jax
import jax.numpy as jnp
from jax.experimental import pallas as pl
from jax.experimental.pallas import tpu as pltpu


HIDDEN = 256          # matches LunarLayer.hidden_size
MAX_TILE_N = 2048     # per-step row tile upper bound (multiple of 128)


def _lunar_mlp_kernel(x_ref, w1_ref, b1_ref, w2_ref, b2_ref,
                      w3_ref, b3_ref, w4t_ref, b4_ref, o_ref, *, act_dtype):
    # x_ref: (tile_n, k) block of aggregated distances, already in MXU dtype.
    # Weights are (in, out) in the MXU compute dtype (bf16 or f32).
    # Biases stay f32; matmuls accumulate in f32; tanh runs in `act_dtype`
    # (bf16 on v6e/v7x for EUP throughput, f32 on v5e / exact path).
    mxu_dt = w1_ref.dtype

    h = jnp.tanh(
        (jnp.dot(x_ref[...], w1_ref[...], preferred_element_type=jnp.float32)
         + b1_ref[...]).astype(act_dtype))
    h = jnp.tanh(
        (jnp.dot(h.astype(mxu_dt), w2_ref[...],
                 preferred_element_type=jnp.float32)
         + b2_ref[...]).astype(act_dtype))
    h = jnp.tanh(
        (jnp.dot(h.astype(mxu_dt), w3_ref[...],
                 preferred_element_type=jnp.float32)
         + b3_ref[...]).astype(act_dtype))

    # Final 256 -> 1 layer: contract the hidden dim of h against the W4
    # row-vector (1, 256) so the result is already lane-dense (1, tile_n).
    logits = jax.lax.dot_general(
        w4t_ref[...], h.astype(mxu_dt),
        dimension_numbers=(((1,), (1,)), ((), ())),
        preferred_element_type=jnp.float32)                 # (1, tile_n)

    # o_ref block is (1, 1, tile_n): contiguous, lane-dense f32 store.
    o_ref[...] = jax.nn.sigmoid(logits + b4_ref[...])[None]


def _choose_tile_n(n, max_tile=MAX_TILE_N):
    """Largest row tile (multiple of 128, <= max_tile) giving >=2, ideally
    even, grid steps so both v7x TensorCores get work and the last tile's
    padding waste stays small."""
    nt = max(2, pl.cdiv(n, max_tile))
    nt = nt + (nt % 2)                       # even number of grid steps
    return max(128, 128 * pl.cdiv(pl.cdiv(n, nt), 128))


def _eup_has_bf16():
    """True if the attached TPU's VPU/EUP have a bf16 path (v6e/v7x)."""
    try:
        kind = jax.devices()[0].device_kind.lower()
    except Exception:  # no devices visible at import time -> assume modern
        return True
    for old in ("v2", "v3", "v4", "v5"):
        if old in kind:
            return False
    return True


@functools.partial(
    jax.jit, static_argnames=("k", "tile_n", "use_bf16", "act_bf16"))
def _lunar_forward_impl(edge_attr, params, *, k, tile_n, use_bf16, act_bf16):
    mxu_dt = jnp.bfloat16 if use_bf16 else jnp.float32
    act_dt = jnp.bfloat16 if act_bf16 else jnp.float32

    x = edge_attr.astype(jnp.float32).reshape(-1, k)   # == self.input_aggr
    n = x.shape[0]

    # Pad node dimension up to a multiple of the row tile; padded rows run
    # through the (bounded) MLP and are sliced away at the end.
    n_pad = ((n + tile_n - 1) // tile_n) * tile_n
    if n_pad != n:
        x = jnp.pad(x, ((0, n_pad - n), (0, 0)))
    num_tiles = n_pad // tile_n
    x = x.astype(mxu_dt)                               # halve the x-tile DMA

    # Weights in MXU dtype; biases / elementwise math stay f32.
    w1 = params["w1"].astype(mxu_dt)
    w2 = params["w2"].astype(mxu_dt)
    w3 = params["w3"].astype(mxu_dt)
    w4t = params["w4"].T.astype(mxu_dt)                # (1, HIDDEN)
    b1 = params["b1"].astype(jnp.float32)
    b2 = params["b2"].astype(jnp.float32)
    b3 = params["b3"].astype(jnp.float32)
    b4 = params["b4"].astype(jnp.float32)              # (1, 1)

    full2 = lambda shape: pl.BlockSpec(shape, lambda i: (0, 0))

    flops = 2 * n_pad * (k * HIDDEN + 2 * HIDDEN * HIDDEN + HIDDEN)
    transcendentals = n_pad * (3 * HIDDEN + 1)
    weight_bytes = sum(int(a.size) * a.dtype.itemsize
                       for a in (w1, b1, w2, b2, w3, b3, w4t, b4))
    bytes_accessed = (int(x.size) * x.dtype.itemsize
                      + weight_bytes + n_pad * 4)

    kernel = functools.partial(_lunar_mlp_kernel, act_dtype=act_dt)

    out = pl.pallas_call(
        kernel,
        out_shape=jax.ShapeDtypeStruct((num_tiles, 1, tile_n), jnp.float32),
        grid_spec=pltpu.PrefetchScalarGridSpec(
            num_scalar_prefetch=0,
            grid=(num_tiles,),
            in_specs=[
                pl.BlockSpec((tile_n, k), lambda i: (i, 0)),   # x tile
                full2((k, HIDDEN)),      full2((1, HIDDEN)),   # W1, b1
                full2((HIDDEN, HIDDEN)), full2((1, HIDDEN)),   # W2, b2
                full2((HIDDEN, HIDDEN)), full2((1, HIDDEN)),   # W3, b3
                full2((1, HIDDEN)),      full2((1, 1)),        # W4^T, b4
            ],
            out_specs=pl.BlockSpec((1, 1, tile_n), lambda i: (i, 0, 0)),
        ),
        compiler_params=pltpu.CompilerParams(
            dimension_semantics=("parallel",),
            vmem_limit_bytes=32 * 1024 * 1024),
        cost_estimate=pl.CostEstimate(
            flops=int(flops),
            transcendentals=int(transcendentals),
            bytes_accessed=int(bytes_accessed)),
    )(x, w1, b1, w2, b2, w3, b3, w4t, b4)

    return out.reshape(-1)[:n]               # torch.squeeze(out, 1)


def lunar_forward(edge_attr, params, *, k, tile_n=None, use_bf16=True,
                  act_bf16=None):
    """Pallas implementation of LUNAR.forward.

    edge_attr: (num_nodes * k,) float32 -- k-NN distances, grouped by node
               (same ordering PyG's propagate/aggregate produces).
    params:    dict of MLP weights, stored (in_features, out_features).
    Returns:   (num_nodes,) float32 anomaly scores in (0, 1).
    """
    n_edges = int(edge_attr.shape[0])
    if n_edges % k != 0:
        raise ValueError(f"len(edge_attr)={n_edges} is not divisible by k={k}")
    n = n_edges // k
    if tile_n is None:
        tile_n = _choose_tile_n(n)
    if tile_n % 128 != 0:
        raise ValueError("tile_n must be a multiple of 128")
    if act_bf16 is None:
        act_bf16 = bool(use_bf16) and _eup_has_bf16()
    return _lunar_forward_impl(edge_attr, params, k=k, tile_n=int(tile_n),
                               use_bf16=bool(use_bf16),
                               act_bf16=bool(act_bf16))


def init_params(key, k):
    """Deterministic init mimicking torch.nn.Linear defaults."""
    def linear(key, fan_in, fan_out):
        kw, kb = jax.random.split(key)
        bound = 1.0 / jnp.sqrt(fan_in)
        w = jax.random.uniform(kw, (fan_in, fan_out), jnp.float32, -bound, bound)
        b = jax.random.uniform(kb, (1, fan_out), jnp.float32, -bound, bound)
        return w, b

    k1, k2, k3, k4 = jax.random.split(key, 4)
    w1, b1 = linear(k1, k, HIDDEN)
    w2, b2 = linear(k2, HIDDEN, HIDDEN)
    w3, b3 = linear(k3, HIDDEN, HIDDEN)
    w4, b4 = linear(k4, HIDDEN, 1)
    return dict(w1=w1, b1=b1, w2=w2, b2=b2, w3=w3, b3=b3, w4=w4, b4=b4)


def reference_forward(edge_attr, params, k):
    """Pure-JAX f32 reference of the module's math (sanity check)."""
    x = edge_attr.reshape(-1, k).astype(jnp.float32)
    h = jnp.tanh(x @ params["w1"] + params["b1"])
    h = jnp.tanh(h @ params["w2"] + params["b2"])
    h = jnp.tanh(h @ params["w3"] + params["b3"])
    return jax.nn.sigmoid(h @ params["w4"] + params["b4"])[:, 0]


if __name__ == "__main__":
    # Small synthetic graph consistent with LUNAR: num_nodes nodes, each with
    # k nearest-neighbor edges carrying a distance as edge_attr.  num_nodes is
    # chosen so the kernel exercises >1 grid step plus row padding.
    num_nodes = 300
    k = 8
    feat_dim = 4

    key = jax.random.PRNGKey(0)
    k_x, k_ea, k_params = jax.random.split(key, 3)

    # data.x / data.edge_index are unused by the math (messages are just
    # edge_attr) but constructed for fidelity with the module's inputs.
    x_nodes = jax.random.normal(k_x, (num_nodes, feat_dim), jnp.float32)
    src = jnp.repeat(jnp.arange(num_nodes), k)
    dst = (src + 1 + jnp.tile(jnp.arange(k), num_nodes)) % num_nodes
    edge_index = jnp.stack([src, dst])                        # (2, num_nodes*k)
    edge_attr = jnp.abs(jax.random.normal(k_ea, (num_nodes * k,), jnp.float32))

    params = init_params(k_params, k)
    ref = reference_forward(edge_attr, params, k)

    # Exact-semantics path (f32 matmuls/activations, as the torch module
    # forces f32).
    out_f32 = lunar_forward(edge_attr, params, k=k, use_bf16=False)
    out_f32 = jax.block_until_ready(out_f32)
    assert out_f32.shape == (num_nodes,)
    assert jnp.allclose(out_f32, ref, atol=1e-4, rtol=1e-4), (out_f32, ref)

    # Fast path (bf16 MXU inputs, bf16 activations where supported, f32
    # accumulation) -- relaxed tolerance.
    out = lunar_forward(edge_attr, params, k=k)
    out = jax.block_until_ready(out)
    assert out.shape == (num_nodes,)
    assert jnp.allclose(out, ref, atol=5e-2, rtol=0.0), (out, ref)

    print("KERNEL_OK")
</pallas_src>

<mosaic_0001>
module attributes {stable_mosaic.version = 11 : i64} {
  func.func @_lunar_mlp_kernel(%arg0: i32, %arg1: memref<256x8xf32, #tpu.memory_space<vmem>>, %arg2: memref<8x256xf32, #tpu.memory_space<vmem>>, %arg3: memref<1x256xf32, #tpu.memory_space<vmem>>, %arg4: memref<256x256xf32, #tpu.memory_space<vmem>>, %arg5: memref<1x256xf32, #tpu.memory_space<vmem>>, %arg6: memref<256x256xf32, #tpu.memory_space<vmem>>, %arg7: memref<1x256xf32, #tpu.memory_space<vmem>>, %arg8: memref<1x256xf32, #tpu.memory_space<vmem>>, %arg9: memref<1x1xf32, #tpu.memory_space<vmem>>, %arg10: memref<1x1x256xf32, #tpu.memory_space<vmem>>) attributes {dimension_semantics = [#tpu.dimension_semantics<parallel>], iteration_bounds = array<i64: 2>, scalar_prefetch = 0 : i64, scratch_operands = 0 : i64, tpu.core_type = #tpu.core_type<tc>, window_params = [{transform_indices = @transform_0, window_bounds = array<i64: 256, 8>}, {pipeline_mode = #tpu.pipeline_mode<synchronous>, transform_indices = @transform_1, window_bounds = array<i64: 8, 256>}, {pipeline_mode = #tpu.pipeline_mode<synchronous>, transform_indices = @transform_2, window_bounds = array<i64: 1, 256>}, {pipeline_mode = #tpu.pipeline_mode<synchronous>, transform_indices = @transform_3, window_bounds = array<i64: 256, 256>}, {pipeline_mode = #tpu.pipeline_mode<synchronous>, transform_indices = @transform_4, window_bounds = array<i64: 1, 256>}, {pipeline_mode = #tpu.pipeline_mode<synchronous>, transform_indices = @transform_5, window_bounds = array<i64: 256, 256>}, {pipeline_mode = #tpu.pipeline_mode<synchronous>, transform_indices = @transform_6, window_bounds = array<i64: 1, 256>}, {pipeline_mode = #tpu.pipeline_mode<synchronous>, transform_indices = @transform_7, window_bounds = array<i64: 1, 256>}, {pipeline_mode = #tpu.pipeline_mode<synchronous>, transform_indices = @transform_8, window_bounds = array<i64: 1, 1>}, {transform_indices = @transform_9, window_bounds = array<i64: 1, 1, 256>}]} {
    %c0 = arith.constant 0 : index
    %c0_0 = arith.constant 0 : index
    %0 = vector.load %arg1[%c0, %c0_0] : memref<256x8xf32, #tpu.memory_space<vmem>>, vector<256x8xf32>
    %c0_1 = arith.constant 0 : index
    %c0_2 = arith.constant 0 : index
    %1 = vector.load %arg2[%c0_1, %c0_2] : memref<8x256xf32, #tpu.memory_space<vmem>>, vector<8x256xf32>
    %cst = arith.constant dense<0.000000e+00> : vector<256x256xf32>
    %2 = tpu.matmul %0, %1, %cst {dimension_numbers = #tpu.dot_dimension_numbers<[1], [0], [0], [1], [0, 0, 1, 1], [], []>} : vector<256x8xf32>, vector<8x256xf32>, vector<256x256xf32> -> vector<256x256xf32>
    %c0_3 = arith.constant 0 : index
    %c0_4 = arith.constant 0 : index
    %3 = vector.load %arg3[%c0_3, %c0_4] : memref<1x256xf32, #tpu.memory_space<vmem>>, vector<1x256xf32>
    %4 = vector.broadcast %3 : vector<1x256xf32> to vector<256x256xf32>
    %5 = arith.addf %2, %4 : vector<256x256xf32>
    %6 = math.tanh %5 : vector<256x256xf32>
    %c0_5 = arith.constant 0 : index
    %c0_6 = arith.constant 0 : index
    %7 = vector.load %arg4[%c0_5, %c0_6] : memref<256x256xf32, #tpu.memory_space<vmem>>, vector<256x256xf32>
    %cst_7 = arith.constant dense<0.000000e+00> : vector<256x256xf32>
    %8 = tpu.matmul %6, %7, %cst_7 {dimension_numbers = #tpu.dot_dimension_numbers<[1], [0], [0], [1], [0, 0, 1, 1], [], []>} : vector<256x256xf32>, vector<256x256xf32>, vector<256x256xf32> -> vector<256x256xf32>
    %c0_8 = arith.constant 0 : index
    %c0_9 = arith.constant 0 : index
    %9 = vector.load %arg5[%c0_8, %c0_9] : memref<1x256xf32, #tpu.memory_space<vmem>>, vector<1x256xf32>
    %10 = vector.broadcast %9 : vector<1x256xf32> to vector<256x256xf32>
    %11 = arith.addf %8, %10 : vector<256x256xf32>
    %12 = math.tanh %11 : vector<256x256xf32>
    %c0_10 = arith.constant 0 : index
    %c0_11 = arith.constant 0 : index
    %13 = vector.load %arg6[%c0_10, %c0_11] : memref<256x256xf32, #tpu.memory_space<vmem>>, vector<256x256xf32>
    %cst_12 = arith.constant dense<0.000000e+00> : vector<256x256xf32>
    %14 = tpu.matmul %12, %13, %cst_12 {dimension_numbers = #tpu.dot_dimension_numbers<[1], [0], [0], [1], [0, 0, 1, 1], [], []>} : vector<256x256xf32>, vector<256x256xf32>, vector<256x256xf32> -> vector<256x256xf32>
    %c0_13 = arith.constant 0 : index
    %c0_14 = arith.constant 0 : index
    %15 = vector.load %arg7[%c0_13, %c0_14] : memref<1x256xf32, #tpu.memory_space<vmem>>, vector<1x256xf32>
    %16 = vector.broadcast %15 : vector<1x256xf32> to vector<256x256xf32>
    %17 = arith.addf %14, %16 : vector<256x256xf32>
    %18 = math.tanh %17 : vector<256x256xf32>
    %c0_15 = arith.constant 0 : index
    %c0_16 = arith.constant 0 : index
    %19 = vector.load %arg8[%c0_15, %c0_16] : memref<1x256xf32, #tpu.memory_space<vmem>>, vector<1x256xf32>
    %cst_17 = arith.constant dense<0.000000e+00> : vector<1x256xf32>
    %20 = tpu.matmul %19, %18, %cst_17 {dimension_numbers = #tpu.dot_dimension_numbers<[1], [1], [0], [0], [0, 0, 1, 0], [], []>} : vector<1x256xf32>, vector<256x256xf32>, vector<1x256xf32> -> vector<1x256xf32>
    %c0_18 = arith.constant 0 : index
    %c0_19 = arith.constant 0 : index
    %21 = vector.load %arg9[%c0_18, %c0_19] : memref<1x1xf32, #tpu.memory_space<vmem>>, vector<1x1xf32>
    %22 = vector.broadcast %21 : vector<1x1xf32> to vector<1x256xf32>
    %23 = arith.addf %20, %22 : vector<1x256xf32>
    %24 = arith.negf %23 : vector<1x256xf32>
    %25 = math.exp %24 : vector<1x256xf32>
    %cst_20 = arith.constant 1.000000e+00 : f32
    %26 = vector.broadcast %cst_20 : f32 to vector<1x256xf32>
    %27 = arith.addf %26, %25 : vector<1x256xf32>
    %28 = arith.divf %26, %27 : vector<1x256xf32>
    %29 = vector.shape_cast %28 : vector<1x256xf32> to vector<1x1x256xf32>
    %c0_21 = arith.constant 0 : index
    %c0_22 = arith.constant 0 : index
    %c0_23 = arith.constant 0 : index
    %30 = vector.load %arg10[%c0_21, %c0_22, %c0_23] : memref<1x1x256xf32, #tpu.memory_space<vmem>>, vector<1x1x256xf32>
    tpu.vector_store %arg10[%c0_21, %c0_22, %c0_23], %29 {strides = array<i32>} : memref<1x1x256xf32, #tpu.memory_space<vmem>>, vector<1x1x256xf32>,
    return
  }
  func.func @transform_0(%arg0: i32) -> (i32, i32) {
    %c0_i32 = arith.constant 0 : i32
    %c0_i32_0 = arith.constant 0 : i32
    return %arg0, %c0_i32 : i32, i32
  }
  func.func @transform_1(%arg0: i32) -> (i32, i32) {
    %c0_i32 = arith.constant 0 : i32
    %c0_i32_0 = arith.constant 0 : i32
    %c0_i32_1 = arith.constant 0 : i32
    return %c0_i32, %c0_i32_0 : i32, i32
  }
  func.func @transform_2(%arg0: i32) -> (i32, i32) {
    %c0_i32 = arith.constant 0 : i32
    %c0_i32_0 = arith.constant 0 : i32
    %c0_i32_1 = arith.constant 0 : i32
    return %c0_i32, %c0_i32_0 : i32, i32
  }
  func.func @transform_3(%arg0: i32) -> (i32, i32) {
    %c0_i32 = arith.constant 0 : i32
    %c0_i32_0 = arith.constant 0 : i32
    %c0_i32_1 = arith.constant 0 : i32
    return %c0_i32, %c0_i32_0 : i32, i32
  }
  func.func @transform_4(%arg0: i32) -> (i32, i32) {
    %c0_i32 = arith.constant 0 : i32
    %c0_i32_0 = arith.constant 0 : i32
    %c0_i32_1 = arith.constant 0 : i32
    return %c0_i32, %c0_i32_0 : i32, i32
  }
  func.func @transform_5(%arg0: i32) -> (i32, i32) {
    %c0_i32 = arith.constant 0 : i32
    %c0_i32_0 = arith.constant 0 : i32
    %c0_i32_1 = arith.constant 0 : i32
    return %c0_i32, %c0_i32_0 : i32, i32
  }
  func.func @transform_6(%arg0: i32) -> (i32, i32) {
    %c0_i32 = arith.constant 0 : i32
    %c0_i32_0 = arith.constant 0 : i32
    %c0_i32_1 = arith.constant 0 : i32
    return %c0_i32, %c0_i32_0 : i32, i32
  }
  func.func @transform_7(%arg0: i32) -> (i32, i32) {
    %c0_i32 = arith.constant 0 : i32
    %c0_i32_0 = arith.constant 0 : i32
    %c0_i32_1 = arith.constant 0 : i32
    return %c0_i32, %c0_i32_0 : i32, i32
  }
  func.func @transform_8(%arg0: i32) -> (i32, i32) {
    %c0_i32 = arith.constant 0 : i32
    %c0_i32_0 = arith.constant 0 : i32
    %c0_i32_1 = arith.constant 0 : i32
    return %c0_i32, %c0_i32_0 : i32, i32
  }
  func.func @transform_9(%arg0: i32) -> (i32, i32, i32) {
    %c0_i32 = arith.constant 0 : i32
    %c0_i32_0 = arith.constant 0 : i32
    %c0_i32_1 = arith.constant 0 : i32
    return %arg0, %c0_i32, %c0_i32_0 : i32, i32, i32
  }
}

</mosaic_0001>

<llo_original>
// kernel: _lunar_forward_impl.1
$region0: #{_lunar_forward_impl.1}
  #allocation0 [shape = 'u32[]', space=smem, size = 0x4, offset = 0x4, fixed_abs, tag = 'smem constant byte address 0x4 - core index']
  #allocation1 [shape = 'u32[144,128]{1,0:T(1,128)}', space=vmem, size = 0x12000, scoped, tag = 'internal scratch']
  #allocation2 [shape = 'f32[1,1]{1,0:T(1,128)S(1)}', space=vmem, size = 0x200, scoped, tag = 'scoped memory for _lunar_forward_impl.1']
  %s0 = inlined_call_operand.vmem [shape: f32[512,8], index: 0, kind: input, shape index: {}]
  %s1 = inlined_call_operand.vmem [shape: f32[8,256], index: 1, kind: input, shape index: {}]
  %s2 = inlined_call_operand.vmem [shape: f32[1,256], index: 2, kind: input, shape index: {}]
  %s3 = inlined_call_operand.vmem [shape: f32[256,256], index: 3, kind: input, shape index: {}]
  %s4 = inlined_call_operand.vmem [shape: f32[1,256], index: 4, kind: input, shape index: {}]
  %s5 = inlined_call_operand.vmem [shape: f32[256,256], index: 5, kind: input, shape index: {}]
  %s6 = inlined_call_operand.vmem [shape: f32[1,256], index: 6, kind: input, shape index: {}]
  %s7 = inlined_call_operand.vmem [shape: f32[1,256], index: 7, kind: input, shape index: {}]
  %s8 = inlined_call_operand.<no memory space> [shape: f32[1,1], index: 8, kind: input, shape index: {}]
  %s9 = inlined_call_operand.hbm [shape: f32[2,1,256], index: 9, kind: output, shape index: {}]
  %s10 = sld [smem:[#allocation0]]
  $region69: #{_lunar_forward_impl.1} parent=0
    _
  %s12 = ssub.s32 1, %s10
  %s13 = scalar_select 0, %s12, %s10
  %v14 = vstv %s8
  %15 = vst [vmem:[#allocation2] sm:$0x1] %v14
  $region1: #{_lunar_forward_impl.1} parent=0
    #allocation3 [shape = 'u8[2048]{0}', space=vmem, size = 0x800, scoped, tag = 'output window, operand 0']
    #allocation4 [shape = 's32[2]{0}', space=sflag, size = 0x8, scoped, tag = 'scoped memory for _lunar_forward_impl.1']
    %16 = vsyncpa [#allocation4], 0
    %s17 = scalar_lea.sflag [#allocation4], 1
    %18 = vsyncpa %s17, 0
    loop: start=0, step=1, limit=4
    $region2: #{_lunar_forward_impl.1} parent=1 // loop_pre_header
      _
    $region3: #{_lunar_forward_impl.1} parent=1 // loop_header
      %s20 = sphi 0, %s24
      %p21 = scmp.ge.s32.totalorder %s20, 4
      %s30 = sphi 0, %s32
      %s33 = sphi 0, %s30
      %s34 = sphi 0, %s33
      %s50 = sphi 0, %s34
      %s54 = sphi 0, %s54
      %s56 = sphi 0, %s54
      %s57 = sphi 0, %s56
      %s71 = sphi 0, %s57
      %s75 = sphi 0, %s75
      %s77 = sphi 0, %s75
      %s78 = sphi 0, %s77
      %s92 = sphi 0, %s78
      %s96 = sphi 0, %s96
      %s98 = sphi 0, %s96
      %s99 = sphi 0, %s98
      %s113 = sphi 0, %s99
      %s117 = sphi 0, %s117
      %s119 = sphi 0, %s117
      %s120 = sphi 0, %s119
      %s134 = sphi 0, %s120
      %s138 = sphi 0, %s138
      %s140 = sphi 0, %s138
      %s141 = sphi 0, %s140
      %s155 = sphi 0, %s141
      %s159 = sphi 0, %s159
      %s161 = sphi 0, %s159
      %s162 = sphi 0, %s161
      %s176 = sphi 0, %s162
      %s180 = sphi 0, %s180
      %s182 = sphi 0, %s180
      %s183 = sphi 0, %s182
      %s197 = sphi 0, %s183
      %s201 = sphi 0, %s201
      %s203 = sphi 0, %s201
      %s204 = sphi 0, %s203
      %s218 = sphi 0, %s204
      %s224 = sphi 0, %s226
      %s227 = sphi 0, %s224
      %s228 = sphi 0, %s227
      %s244 = sphi 0, %s228
    $region4: #{_lunar_forward_impl.1} parent=1 // loop_header_branch
      %23 = sbr.rel (%p21) target = $region8
    $region5: #{_lunar_forward_impl.1} parent=1 // loop_body
      %s25 = ssub.s32 %s20, 1
      %s26 = ssub.s32 %s20, 2
      %s27 = sadd.s32 %s20, 1
      %s28 = ssub.s32 %s20, %s27
      %p29 = scmp.eq.s32.totalorder %s28, 0
      %s31 = sadd.s32 %s30, 1
      %s32 = scalar_select %p29, %s30, %s31
      %p35 = pneg %p29
      %p36 = scmp.eq.s32.totalorder %s20, 1
      %p37 = por %p35, %p36
      %p38 = scmp.ne.s32.totalorder %s30, %s33
      %p39 = scmp.eq.s32.totalorder %s20, 0
      %p40 = por %p38, %p39
      %p41 = scmp.ne.s32.totalorder %s30, %s33
      %p42 = scmp.eq.s32.totalorder %s25, 1
      %p43 = por %p41, %p42
      %p44 = scmp.ne.s32.totalorder %s33, %s34
      %p45 = scmp.eq.s32.totalorder %s25, 0
      %p46 = por %p44, %p45
      %p47 = scmp.ne.s32.totalorder %s33, %s34
      %p48 = scmp.eq.s32.totalorder %s26, 1
      %p49 = por %p47, %p48
      %p51 = scmp.ne.s32.totalorder %s34, %s50
      %p52 = scmp.eq.s32.totalorder %s26, 0
      %p53 = por %p51, %p52
      %s55 = sadd.s32 %s54, 1
      %p58 = scmp.eq.s32.totalorder %s20, 1
      %p59 = scmp.ne.s32.totalorder %s54, %s56
      %p60 = scmp.eq.s32.totalorder %s20, 0
      %p61 = por %p59, %p60
      %p62 = scmp.ne.s32.totalorder %s54, %s56
      %p63 = scmp.eq.s32.totalorder %s25, 1
      %p64 = por %p62, %p63
      %p65 = scmp.ne.s32.totalorder %s56, %s57
      %p66 = scmp.eq.s32.totalorder %s25, 0
      %p67 = por %p65, %p66
      %p68 = scmp.ne.s32.totalorder %s56, %s57
      %p69 = scmp.eq.s32.totalorder %s26, 1
      %p70 = por %p68, %p69
      %p72 = scmp.ne.s32.totalorder %s57, %s71
      %p73 = scmp.eq.s32.totalorder %s26, 0
      %p74 = por %p72, %p73
      %s76 = sadd.s32 %s75, 1
      %p79 = scmp.eq.s32.totalorder %s20, 1
      %p80 = scmp.ne.s32.totalorder %s75, %s77
      %p81 = scmp.eq.s32.totalorder %s20, 0
      %p82 = por %p80, %p81
      %p83 = scmp.ne.s32.totalorder %s75, %s77
      %p84 = scmp.eq.s32.totalorder %s25, 1
      %p85 = por %p83, %p84
      %p86 = scmp.ne.s32.totalorder %s77, %s78
      %p87 = scmp.eq.s32.totalorder %s25, 0
      %p88 = por %p86, %p87
      %p89 = scmp.ne.s32.totalorder %s77, %s78
      %p90 = scmp.eq.s32.totalorder %s26, 1
      %p91 = por %p89, %p90
      %p93 = scmp.ne.s32.totalorder %s78, %s92
      %p94 = scmp.eq.s32.totalorder %s26, 0
      %p95 = por %p93, %p94
      %s97 = sadd.s32 %s96, 1
      %p100 = scmp.eq.s32.totalorder %s20, 1
      %p101 = scmp.ne.s32.totalorder %s96, %s98
      %p102 = scmp.eq.s32.totalorder %s20, 0
      %p103 = por %p101, %p102
      %p104 = scmp.ne.s32.totalorder %s96, %s98
      %p105 = scmp.eq.s32.totalorder %s25, 1
      %p106 = por %p104, %p105
      %p107 = scmp.ne.s32.totalorder %s98, %s99
      %p108 = scmp.eq.s32.totalorder %s25, 0
      %p109 = por %p107, %p108
      %p110 = scmp.ne.s32.totalorder %s98, %s99
      %p111 = scmp.eq.s32.totalorder %s26, 1
      %p112 = por %p110, %p111
      %p114 = scmp.ne.s32.totalorder %s99, %s113
      %p115 = scmp.eq.s32.totalorder %s26, 0
      %p116 = por %p114, %p115
      %s118 = sadd.s32 %s117, 1
      %p121 = scmp.eq.s32.totalorder %s20, 1
      %p122 = scmp.ne.s32.totalorder %s117, %s119
      %p123 = scmp.eq.s32.totalorder %s20, 0
      %p124 = por %p122, %p123
      %p125 = scmp.ne.s32.totalorder %s117, %s119
      %p126 = scmp.eq.s32.totalorder %s25, 1
      %p127 = por %p125, %p126
      %p128 = scmp.ne.s32.totalorder %s119, %s120
      %p129 = scmp.eq.s32.totalorder %s25, 0
      %p130 = por %p128, %p129
      %p131 = scmp.ne.s32.totalorder %s119, %s120
      %p132 = scmp.eq.s32.totalorder %s26, 1
      %p133 = por %p131, %p132
      %p135 = scmp.ne.s32.totalorder %s120, %s134
      %p136 = scmp.eq.s32.totalorder %s26, 0
      %p137 = por %p135, %p136
      %s139 = sadd.s32 %s138, 1
      %p142 = scmp.eq.s32.totalorder %s20, 1
      %p143 = scmp.ne.s32.totalorder %s138, %s140
      %p144 = scmp.eq.s32.totalorder %s20, 0
      %p145 = por %p143, %p144
      %p146 = scmp.ne.s32.totalorder %s138, %s140
      %p147 = scmp.eq.s32.totalorder %s25, 1
      %p148 = por %p146, %p147
      %p149 = scmp.ne.s32.totalorder %s140, %s141
      %p150 = scmp.eq.s32.totalorder %s25, 0
      %p151 = por %p149, %p150
      %p152 = scmp.ne.s32.totalorder %s140, %s141
      %p153 = scmp.eq.s32.totalorder %s26, 1
      %p154 = por %p152, %p153
      %p156 = scmp.ne.s32.totalorder %s141, %s155
      %p157 = scmp.eq.s32.totalorder %s26, 0
      %p158 = por %p156, %p157
      %s160 = sadd.s32 %s159, 1
      %p163 = scmp.eq.s32.totalorder %s20, 1
      %p164 = scmp.ne.s32.totalorder %s159, %s161
      %p165 = scmp.eq.s32.totalorder %s20, 0
      %p166 = por %p164, %p165
      %p167 = scmp.ne.s32.totalorder %s159, %s161
      %p168 = scmp.eq.s32.totalorder %s25, 1
      %p169 = por %p167, %p168
      %p170 = scmp.ne.s32.totalorder %s161, %s162
      %p171 = scmp.eq.s32.totalorder %s25, 0
      %p172 = por %p170, %p171
      %p173 = scmp.ne.s32.totalorder %s161, %s162
      %p174 = scmp.eq.s32.totalorder %s26, 1
      %p175 = por %p173, %p174
      %p177 = scmp.ne.s32.totalorder %s162, %s176
      %p178 = scmp.eq.s32.totalorder %s26, 0
      %p179 = por %p177, %p178
      %s181 = sadd.s32 %s180, 1
      %p184 = scmp.eq.s32.totalorder %s20, 1
      %p185 = scmp.ne.s32.totalorder %s180, %s182
      %p186 = scmp.eq.s32.totalorder %s20, 0
      %p187 = por %p185, %p186
      %p188 = scmp.ne.s32.totalorder %s180, %s182
      %p189 = scmp.eq.s32.totalorder %s25, 1
      %p190 = por %p188, %p189
      %p191 = scmp.ne.s32.totalorder %s182, %s183
      %p192 = scmp.eq.s32.totalorder %s25, 0
      %p193 = por %p191, %p192
      %p194 = scmp.ne.s32.totalorder %s182, %s183
      %p195 = scmp.eq.s32.totalorder %s26, 1
      %p196 = por %p194, %p195
      %p198 = scmp.ne.s32.totalorder %s183, %s197
      %p199 = scmp.eq.s32.totalorder %s26, 0
      %p200 = por %p198, %p199
      %s202 = sadd.s32 %s201, 1
      %p205 = scmp.eq.s32.totalorder %s20, 1
      %p206 = scmp.ne.s32.totalorder %s201, %s203
      %p207 = scmp.eq.s32.totalorder %s20, 0
      %p208 = por %p206, %p207
      %p209 = scmp.ne.s32.totalorder %s201, %s203
      %p210 = scmp.eq.s32.totalorder %s25, 1
      %p211 = por %p209, %p210
      %p212 = scmp.ne.s32.totalorder %s203, %s204
      %p213 = scmp.eq.s32.totalorder %s25, 0
      %p214 = por %p212, %p213
      %p215 = scmp.ne.s32.totalorder %s203, %s204
      %p216 = scmp.eq.s32.totalorder %s26, 1
      %p217 = por %p215, %p216
      %p219 = scmp.ne.s32.totalorder %s204, %s218
      %p220 = scmp.eq.s32.totalorder %s26, 0
      %p221 = por %p219, %p220
      %s222 = ssub.s32 %s20, %s27
      %p223 = scmp.eq.s32.totalorder %s222, 0
      %s225 = sadd.s32 %s224, 1
      %s226 = scalar_select %p223, %s224, %s225
      %p229 = pneg %p223
      %p230 = scmp.eq.s32.totalorder %s20, 1
      %p231 = por %p229, %p230
      %p232 = scmp.ne.s32.totalorder %s224, %s227
      %p233 = scmp.eq.s32.totalorder %s20, 0
      %p234 = por %p232, %p233
      %p235 = scmp.ne.s32.totalorder %s224, %s227
      %p236 = scmp.eq.s32.totalorder %s25, 1
      %p237 = por %p235, %p236
      %p238 = scmp.ne.s32.totalorder %s227, %s228
      %p239 = scmp.eq.s32.totalorder %s25, 0
      %p240 = por %p238, %p239
      %p241 = scmp.ne.s32.totalorder %s227, %s228
      %p242 = scmp.eq.s32.totalorder %s26, 1
      %p243 = por %p241, %p242
      %p245 = scmp.ne.s32.totalorder %s228, %s244
      %p246 = scmp.eq.s32.totalorder %s26, 0
      %p247 = por %p245, %p246
      %p248 = scmp.le.s32.totalorder 1, %s20
      %p249 = scmp.lt.s32.totalorder %s20, 3
      %p250 = pnand %p248, %p249
      %p251 = pneg %p250
      // Predicated region
      $region9: #{_lunar_forward_impl.1} parent=5 // pred_check
        _
      $region10: #{_lunar_forward_impl.1} parent=5 // pred_check_branch
        %253 = sbr.rel (%p250) target = $region12
      $region11: #{_lunar_forward_impl.1} parent=5 // pred_region
        %s254 = ssub.s32 %s20, 1
        // Predicated region
        $region13: #{_lunar_forward_impl.1} parent=11 // pred_check
          %p255 = pneg %p67
        $region14: #{_lunar_forward_impl.1} parent=11 // pred_check_branch
          %257 = sbr.rel (%p255) target = $region16
        $region15: #{_lunar_forward_impl.1} parent=11 // pred_region
          _
        $region16: #{_lunar_forward_impl.1} parent=11 // pred_fallthru
          _
        // Predicated region
        $region17: #{_lunar_forward_impl.1} parent=11 // pred_check
          %p258 = pneg %p88
        $region18: #{_lunar_forward_impl.1} parent=11 // pred_check_branch
          %260 = sbr.rel (%p258) target = $region20
        $region19: #{_lunar_forward_impl.1} parent=11 // pred_region
          _
        $region20: #{_lunar_forward_impl.1} parent=11 // pred_fallthru
          _
        // Predicated region
        $region21: #{_lunar_forward_impl.1} parent=11 // pred_check
          %p261 = pneg %p109
        $region22: #{_lunar_forward_impl.1} parent=11 // pred_check_branch
          %263 = sbr.rel (%p261) target = $region24
        $region23: #{_lunar_forward_impl.1} parent=11 // pred_region
          _
        $region24: #{_lunar_forward_impl.1} parent=11 // pred_fallthru
          _
        // Predicated region
        $region25: #{_lunar_forward_impl.1} parent=11 // pred_check
          %p264 = pneg %p130
        $region26: #{_lunar_forward_impl.1} parent=11 // pred_check_branch
          %266 = sbr.rel (%p264) target = $region28
        $region27: #{_lunar_forward_impl.1} parent=11 // pred_region
          _
        $region28: #{_lunar_forward_impl.1} parent=11 // pred_fallthru
          _
        // Predicated region
        $region29: #{_lunar_forward_impl.1} parent=11 // pred_check
          %p267 = pneg %p151
        $region30: #{_lunar_forward_impl.1} parent=11 // pred_check_branch
          %269 = sbr.rel (%p267) target = $region32
        $region31: #{_lunar_forward_impl.1} parent=11 // pred_region
          _
        $region32: #{_lunar_forward_impl.1} parent=11 // pred_fallthru
          _
        // Predicated region
        $region33: #{_lunar_forward_impl.1} parent=11 // pred_check
          %p270 = pneg %p172
        $region34: #{_lunar_forward_impl.1} parent=11 // pred_check_branch
          %272 = sbr.rel (%p270) target = $region36
        $region35: #{_lunar_forward_impl.1} parent=11 // pred_region
          _
        $region36: #{_lunar_forward_impl.1} parent=11 // pred_fallthru
          _
        // Predicated region
        $region37: #{_lunar_forward_impl.1} parent=11 // pred_check
          %p273 = pneg %p193
        $region38: #{_lunar_forward_impl.1} parent=11 // pred_check_branch
          %275 = sbr.rel (%p273) target = $region40
        $region39: #{_lunar_forward_impl.1} parent=11 // pred_region
          _
        $region40: #{_lunar_forward_impl.1} parent=11 // pred_fallthru
          _
        // Predicated region
        $region41: #{_lunar_forward_impl.1} parent=11 // pred_check
          %p276 = pneg %p214
        $region42: #{_lunar_forward_impl.1} parent=11 // pred_check_branch
          %278 = sbr.rel (%p276) target = $region44
        $region43: #{_lunar_forward_impl.1} parent=11 // pred_region
          _
        $region44: #{_lunar_forward_impl.1} parent=11 // pred_fallthru
          _
      $region12: #{_lunar_forward_impl.1} parent=5 // pred_fallthru
        _
      %p279 = scmp.lt.s32.totalorder %s20, 2
      // Predicated region
      $region45: #{_lunar_forward_impl.1} parent=5 // pred_check
        %p280 = pneg %p279
      $region46: #{_lunar_forward_impl.1} parent=5 // pred_check_branch
        %282 = sbr.rel (%p280) target = $region48
      $region47: #{_lunar_forward_impl.1} parent=5 // pred_region
        // Predicated region
        $region49: #{_lunar_forward_impl.1} parent=47 // pred_check
          %p283 = pneg %p40
        $region50: #{_lunar_forward_impl.1} parent=47 // pred_check_branch
          %285 = sbr.rel (%p283) target = $region52
        $region51: #{_lunar_forward_impl.1} parent=47 // pred_region
          %s286 = smul.u32 32, %s20
          %p287 = scmp.lt.s32.totalorder %s286, 63
          %s288 = scalar_select %p287, %s286, 63
          %s289 = smul.addr %s288, 8
          %s290 = scalar_lea.vmem %s0, %s289
          %s291 = smul.u32 32, %s20
        $region52: #{_lunar_forward_impl.1} parent=47 // pred_fallthru
          _
      $region48: #{_lunar_forward_impl.1} parent=5 // pred_fallthru
        _
      %p292 = scmp.le.s32.totalorder 1, %s20
      %p293 = scmp.lt.s32.totalorder %s20, 3
      %p294 = pnand %p292, %p293
      %p295 = pneg %p294
      // Predicated region
      $region53: #{_lunar_forward_impl.1} parent=5 // pred_check
        _
      $region54: #{_lunar_forward_impl.1} parent=5 // pred_check_branch
        %297 = sbr.rel (%p294) target = $region56
      $region55: #{_lunar_forward_impl.1} parent=5 // pred_region
        %s298 = ssub.s32 %s20, 1
        %s299 = smul.u32 32, %s25
        %p300 = scmp.lt.s32.totalorder %s299, 63
        %s301 = scalar_select %p300, %s299, 63
        %s302 = smul.addr %s301, 8
        %s303 = scalar_lea.vmem %s0, %s302
        %p304 = pneg %p46
        %p305 = pneg %p43
        %p306 = pneg %p67
        %p307 = pneg %p64
        %p308 = pneg %p88
        %p309 = pneg %p85
        %p310 = pneg %p109
        %p311 = pneg %p106
        %p312 = pneg %p130
        %p313 = pneg %p127
        %p314 = pneg %p151
        %p315 = pneg %p148
        %p316 = pneg %p172
        %p317 = pneg %p169
        %p318 = pneg %p193
        %p319 = pneg %p190
        %p320 = pneg %p214
        %p321 = pneg %p211
        %p322 = pneg %p240
        %p323 = pneg %p237
        %s324 = sand.u32 %s227, 1
        %s325 = scalar_lea.sflag [#allocation4], %s324
        %s326 = sand.u32 %s227, 1
        %s327 = smul.addr %s326, 2
        %s328 = scalar_lea.vmem [#allocation3], %s327
        %s329 = smul.u32 32, %s25
        %p330 = scmp.lt.s32.totalorder %s329, 63
        %s331 = scalar_select %p330, %s329, 63
        %s332 = smul.addr %s331, 8
        %s333 = scalar_lea.vmem %s0, %s332
        %s334 = smul.u32 32, %s25
        %v335 = vld [vmem:[%s333] sm:$0xff]
        %v336 = vld [vmem:[%s333 + $0x8] sm:$0xff]
        %v337 = vld [vmem:[%s333 + $0x10] sm:$0xff]
        %v338 = vld [vmem:[%s333 + $0x18] sm:$0xff]
        %v339 = vld [vmem:[%s333 + $0x20] sm:$0xff]
        %v340 = vld [vmem:[%s333 + $0x28] sm:$0xff]
        %v341 = vld [vmem:[%s333 + $0x30] sm:$0xff]
        %v342 = vld [vmem:[%s333 + $0x38] sm:$0xff]
        %v343 = vld [vmem:[%s333 + $0x40] sm:$0xff]
        %v344 = vld [vmem:[%s333 + $0x48] sm:$0xff]
        %v345 = vld [vmem:[%s333 + $0x50] sm:$0xff]
        %v346 = vld [vmem:[%s333 + $0x58] sm:$0xff]
        %v347 = vld [vmem:[%s333 + $0x60] sm:$0xff]
        %v348 = vld [vmem:[%s333 + $0x68] sm:$0xff]
        %v349 = vld [vmem:[%s333 + $0x70] sm:$0xff]
        %v350 = vld [vmem:[%s333 + $0x78] sm:$0xff]
        %v351 = vld [vmem:[%s333 + $0x80] sm:$0xff]
        %v352 = vld [vmem:[%s333 + $0x88] sm:$0xff]
        %v353 = vld [vmem:[%s333 + $0x90] sm:$0xff]
        %v354 = vld [vmem:[%s333 + $0x98] sm:$0xff]
        %v355 = vld [vmem:[%s333 + $0xa0] sm:$0xff]
        %v356 = vld [vmem:[%s333 + $0xa8] sm:$0xff]
        %v357 = vld [vmem:[%s333 + $0xb0] sm:$0xff]
        %v358 = vld [vmem:[%s333 + $0xb8] sm:$0xff]
        %v359 = vld [vmem:[%s333 + $0xc0] sm:$0xff]
        %v360 = vld [vmem:[%s333 + $0xc8] sm:$0xff]
        %v361 = vld [vmem:[%s333 + $0xd0] sm:$0xff]
        %v362 = vld [vmem:[%s333 + $0xd8] sm:$0xff]
        %v363 = vld [vmem:[%s333 + $0xe0] sm:$0xff]
        %v364 = vld [vmem:[%s333 + $0xe8] sm:$0xff]
        %v365 = vld [vmem:[%s333 + $0xf0] sm:$0xff]
        %v366 = vld [vmem:[%s333 + $0xf8] sm:$0xff]
        %v367 = vld [vmem:[%s1] sm:$0xff]
        %v368 = vld [vmem:[%s1 + $0x8] sm:$0xff]
        %v369 = vld [vmem:[%s2] sm:$0x3]
        %v371 = vlaneseq
        %v372 = vshrl.u32 %v371, 7
        %v373 = vsub.s32 0, %v372
        %v374 = vrot.slane %v369, %v373
        %v375 = vlaneseq
        %v376 = vshrl.u32 %v375, 7
        %v377 = vsub.s32 1, %v376
        %v378 = vrot.slane %v369, %v377
        %vm381 = vcmask 64512
        %v383 = vsel %vm381, %v335, 0
        %v386 = vsel %vm381, %v336, 0
        %v389 = vsel %vm381, %v337, 0
        %v392 = vsel %vm381, %v338, 0
        %v395 = vsel %vm381, %v339, 0
        %v398 = vsel %vm381, %v340, 0
        %v401 = vsel %vm381, %v341, 0
        %v404 = vsel %vm381, %v342, 0
        %v407 = vsel %vm381, %v343, 0
        %v410 = vsel %vm381, %v344, 0
        %v413 = vsel %vm381, %v345, 0
        %v416 = vsel %vm381, %v346, 0
        %v419 = vsel %vm381, %v347, 0
        %v422 = vsel %vm381, %v348, 0
        %v425 = vsel %vm381, %v349, 0
        %v428 = vsel %vm381, %v350, 0
        %v431 = vsel %vm381, %v351, 0
        %v434 = vsel %vm381, %v352, 0
        %v437 = vsel %vm381, %v353, 0
        %v440 = vsel %vm381, %v354, 0
        %v443 = vsel %vm381, %v355, 0
        %v446 = vsel %vm381, %v356, 0
        %v449 = vsel %vm381, %v357, 0
        %v452 = vsel %vm381, %v358, 0
        %v455 = vsel %vm381, %v359, 0
        %v458 = vsel %vm381, %v360, 0
        %v461 = vsel %vm381, %v361, 0
        %v464 = vsel %vm381, %v362, 0
        %v467 = vsel %vm381, %v363, 0
        %v470 = vsel %vm381, %v364, 0
        %v473 = vsel %vm381, %v365, 0
        %v476 = vsel %vm381, %v366, 0
        %478 = vmatprep.subr.mxu0 %v368
        %479 = vmatpush1.msra.mxu0 %v367
        %480 = vmatprep.subr.mxu0 0.0
        %481 = vmatpush1.msra.mxu0 0.0
        %482 = vmatprep.subr.mxu0 0.0
        %483 = vmatpush1.msra.mxu0 0.0
        %484 = vmatprep.subr.mxu0 0.0
        %485 = vmatpush1.msra.mxu0 0.0
        %486 = vmatprep.subr.mxu0 0.0
        %487 = vmatpush1.msra.mxu0 0.0
        %488 = vmatprep.subr.mxu0 0.0
        %489 = vmatpush1.msra.mxu0 0.0
        %490 = vmatprep.subr.mxu0 0.0
        %491 = vmatpush1.msra.mxu0 0.0
        %492 = vmatprep.subr.mxu0 0.0
        %493 = vmatpush1.msra.mxu0 0.0
        %494 = vmatprep.subr.mxu0 0.0
        %495 = vmatpush1.msra.mxu0 0.0
        %496 = vmatprep.subr.mxu0 0.0
        %497 = vmatpush1.msra.mxu0 0.0
        %498 = vmatprep.subr.mxu0 0.0
        %499 = vmatpush1.msra.mxu0 0.0
        %500 = vmatprep.subr.mxu0 0.0
        %501 = vmatpush1.msra.mxu0 0.0
        %502 = vmatprep.subr.mxu0 0.0
        %503 = vmatpush1.msra.mxu0 0.0
        %504 = vmatprep.subr.mxu0 0.0
        %505 = vmatpush1.msra.mxu0 0.0
        %506 = vmatprep.subr.mxu0 0.0
        %507 = vmatpush1.msra.mxu0 0.0
        %508 = vmatprep.subr.mxu0 0.0
        %509 = vmatpush1.msra.mxu0 0.0
        %510 = vmatprep.subr.mxu0 0.0
        %511 = vmatpush1.msra.mxu0 0.0
        %512 = vmatprep.subr.mxu0 0.0
        %513 = vmatpush1.msra.mxu0 0.0
        %514 = vmatprep.subr.mxu0 0.0
        %515 = vmatpush1.msra.mxu0 0.0
        %516 = vmatprep.subr.mxu0 0.0
        %517 = vmatpush1.msra.mxu0 0.0
        %518 = vmatprep.subr.mxu0 0.0
        %519 = vmatpush1.msra.mxu0 0.0
        %520 = vmatprep.subr.mxu0 0.0
        %521 = vmatpush1.msra.mxu0 0.0
        %522 = vmatprep.subr.mxu0 0.0
        %523 = vmatpush1.msra.mxu0 0.0
        %524 = vmatprep.subr.mxu0 0.0
        %525 = vmatpush1.msra.mxu0 0.0
        %526 = vmatprep.subr.mxu0 0.0
        %527 = vmatpush1.msra.mxu0 0.0
        %528 = vmatprep.subr.mxu0 0.0
        %529 = vmatpush1.msra.mxu0 0.0
        %530 = vmatprep.subr.mxu0 0.0
        %531 = vmatpush1.msra.mxu0 0.0
        %532 = vmatprep.subr.mxu0 0.0
        %533 = vmatpush1.msra.mxu0 0.0
        %534 = vmatprep.subr.mxu0 0.0
        %535 = vmatpush1.msra.mxu0 0.0
        %536 = vmatprep.subr.mxu0 0.0
        %537 = vmatpush1.msra.mxu0 0.0
        %538 = vmatprep.subr.mxu0 0.0
        %539 = vmatpush1.msra.mxu0 0.0
        %540 = vmatprep.subr.mxu0 0.0
        %541 = vmatpush1.msra.mxu0 0.0
        %542 = vmatprep.mubr.f32.mxu0 0.0
        %543 = vmatmul.mubr.f32.gmra.mrb[0].mxu0 %v383
        %v544 = vpop.f32.mrb[0].mxu0
        %v545 = vadd.f32 %v374, %v544
        %v546 = vpop.f32.mrb[0].mxu0
        %v547 = vadd.f32 %v378, %v546
        %548 = vmatprep.mubr.f32.mxu0 0.0
        %549 = vmatmul.mubr.f32.gmra.mrb[0].mxu0 %v386
        %v550 = vpop.f32.mrb[0].mxu0
        %v551 = vadd.f32 %v374, %v550
        %v552 = vpop.f32.mrb[0].mxu0
        %v553 = vadd.f32 %v378, %v552
        %554 = vmatprep.mubr.f32.mxu0 0.0
        %555 = vmatmul.mubr.f32.gmra.mrb[0].mxu0 %v389
        %v556 = vpop.f32.mrb[0].mxu0
        %v557 = vadd.f32 %v374, %v556
        %v558 = vpop.f32.mrb[0].mxu0
        %v559 = vadd.f32 %v378, %v558
        %560 = vmatprep.mubr.f32.mxu0 0.0
        %561 = vmatmul.mubr.f32.gmra.mrb[0].mxu0 %v392
        %v562 = vpop.f32.mrb[0].mxu0
        %v563 = vadd.f32 %v374, %v562
        %v564 = vpop.f32.mrb[0].mxu0
        %v565 = vadd.f32 %v378, %v564
        %566 = vmatprep.mubr.f32.mxu0 0.0
        %567 = vmatmul.mubr.f32.gmra.mrb[0].mxu0 %v395
        %v568 = vpop.f32.mrb[0].mxu0
        %v569 = vadd.f32 %v374, %v568
        %v570 = vpop.f32.mrb[0].mxu0
        %v571 = vadd.f32 %v378, %v570
        %572 = vmatprep.mubr.f32.mxu0 0.0
        %573 = vmatmul.mubr.f32.gmra.mrb[0].mxu0 %v398
        %v574 = vpop.f32.mrb[0].mxu0
        %v575 = vadd.f32 %v374, %v574
        %v576 = vpop.f32.mrb[0].mxu0
        %v577 = vadd.f32 %v378, %v576
        %578 = vmatprep.mubr.f32.mxu0 0.0
        %579 = vmatmul.mubr.f32.gmra.mrb[0].mxu0 %v401
        %v580 = vpop.f32.mrb[0].mxu0
        %v581 = vadd.f32 %v374, %v580
        %v582 = vpop.f32.mrb[0].mxu0
        %v583 = vadd.f32 %v378, %v582
        %584 = vmatprep.mubr.f32.mxu0 0.0
        %585 = vmatmul.mubr.f32.gmra.mrb[0].mxu0 %v404
        %v586 = vpop.f32.mrb[0].mxu0
        %v587 = vadd.f32 %v374, %v586
        %v588 = vpop.f32.mrb[0].mxu0
        %v589 = vadd.f32 %v378, %v588
        %590 = vmatprep.mubr.f32.mxu0 0.0
        %591 = vmatmul.mubr.f32.gmra.mrb[0].mxu0 %v407
        %v592 = vpop.f32.mrb[0].mxu0
        %v593 = vadd.f32 %v374, %v592
        %v594 = vpop.f32.mrb[0].mxu0
        %v595 = vadd.f32 %v378, %v594
        %596 = vmatprep.mubr.f32.mxu0 0.0
        %597 = vmatmul.mubr.f32.gmra.mrb[0].mxu0 %v410
        %v598 = vpop.f32.mrb[0].mxu0
        %v599 = vadd.f32 %v374, %v598
        %v600 = vpop.f32.mrb[0].mxu0
        %v601 = vadd.f32 %v378, %v600
        %602 = vmatprep.mubr.f32.mxu0 0.0
        %603 = vmatmul.mubr.f32.gmra.mrb[0].mxu0 %v413
        %v604 = vpop.f32.mrb[0].mxu0
        %v605 = vadd.f32 %v374, %v604
        %v606 = vpop.f32.mrb[0].mxu0
        %v607 = vadd.f32 %v378, %v606
        %608 = vmatprep.mubr.f32.mxu0 0.0
        %609 = vmatmul.mubr.f32.gmra.mrb[0].mxu0 %v416
        %v610 = vpop.f32.mrb[0].mxu0
        %v611 = vadd.f32 %v374, %v610
        %v612 = vpop.f32.mrb[0].mxu0
        %v613 = vadd.f32 %v378, %v612
        %614 = vmatprep.mubr.f32.mxu0 0.0
        %615 = vmatmul.mubr.f32.gmra.mrb[0].mxu0 %v419
        %v616 = vpop.f32.mrb[0].mxu0
        %v617 = vadd.f32 %v374, %v616
        %v618 = vpop.f32.mrb[0].mxu0
        %v619 = vadd.f32 %v378, %v618
        %620 = vmatprep.mubr.f32.mxu0 0.0
        %621 = vmatmul.mubr.f32.gmra.mrb[0].mxu0 %v422
        %v622 = vpop.f32.mrb[0].mxu0
        %v623 = vadd.f32 %v374, %v622
        %v624 = vpop.f32.mrb[0].mxu0
        %v625 = vadd.f32 %v378, %v624
        %626 = vmatprep.mubr.f32.mxu0 0.0
        %627 = vmatmul.mubr.f32.gmra.mrb[0].mxu0 %v425
        %v628 = vpop.f32.mrb[0].mxu0
        %v629 = vadd.f32 %v374, %v628
        %v630 = vpop.f32.mrb[0].mxu0
        %v631 = vadd.f32 %v378, %v630
        %632 = vmatprep.mubr.f32.mxu0 0.0
        %633 = vmatmul.mubr.f32.gmra.mrb[0].mxu0 %v428
        %v634 = vpop.f32.mrb[0].mxu0
        %v635 = vadd.f32 %v374, %v634
        %v636 = vpop.f32.mrb[0].mxu0
        %v637 = vadd.f32 %v378, %v636
        %638 = vmatprep.mubr.f32.mxu0 0.0
        %639 = vmatmul.mubr.f32.gmra.mrb[0].mxu0 %v431
        %v640 = vpop.f32.mrb[0].mxu0
        %v641 = vadd.f32 %v374, %v640
        %v642 = vpop.f32.mrb[0].mxu0
        %v643 = vadd.f32 %v378, %v642
        %644 = vmatprep.mubr.f32.mxu0 0.0
        %645 = vmatmul.mubr.f32.gmra.mrb[0].mxu0 %v434
        %v646 = vpop.f32.mrb[0].mxu0
        %v647 = vadd.f32 %v374, %v646
        %v648 = vpop.f32.mrb[0].mxu0
        %v649 = vadd.f32 %v378, %v648
        %650 = vmatprep.mubr.f32.mxu0 0.0
        %651 = vmatmul.mubr.f32.gmra.mrb[0].mxu0 %v437
        %v652 = vpop.f32.mrb[0].mxu0
        %v653 = vadd.f32 %v374, %v652
        %v654 = vpop.f32.mrb[0].mxu0
        %v655 = vadd.f32 %v378, %v654
        %656 = vmatprep.mubr.f32.mxu0 0.0
        %657 = vmatmul.mubr.f32.gmra.mrb[0].mxu0 %v440
        %v658 = vpop.f32.mrb[0].mxu0
        %v659 = vadd.f32 %v374, %v658
        %v660 = vpop.f32.mrb[0].mxu0
        %v661 = vadd.f32 %v378, %v660
        %662 = vmatprep.mubr.f32.mxu0 0.0
        %663 = vmatmul.mubr.f32.gmra.mrb[0].mxu0 %v443
        %v664 = vpop.f32.mrb[0].mxu0
        %v665 = vadd.f32 %v374, %v664
        %v666 = vpop.f32.mrb[0].mxu0
        %v667 = vadd.f32 %v378, %v666
        %668 = vmatprep.mubr.f32.mxu0 0.0
        %669 = vmatmul.mubr.f32.gmra.mrb[0].mxu0 %v446
        %v670 = vpop.f32.mrb[0].mxu0
        %v671 = vadd.f32 %v374, %v670
        %v672 = vpop.f32.mrb[0].mxu0
        %v673 = vadd.f32 %v378, %v672
        %674 = vmatprep.mubr.f32.mxu0 0.0
        %675 = vmatmul.mubr.f32.gmra.mrb[0].mxu0 %v449
        %v676 = vpop.f32.mrb[0].mxu0
        %v677 = vadd.f32 %v374, %v676
        %v678 = vpop.f32.mrb[0].mxu0
        %v679 = vadd.f32 %v378, %v678
        %680 = vmatprep.mubr.f32.mxu0 0.0
        %681 = vmatmul.mubr.f32.gmra.mrb[0].mxu0 %v452
        %v682 = vpop.f32.mrb[0].mxu0
        %v683 = vadd.f32 %v374, %v682
        %v684 = vpop.f32.mrb[0].mxu0
        %v685 = vadd.f32 %v378, %v684
        %686 = vmatprep.mubr.f32.mxu0 0.0
        %687 = vmatmul.mubr.f32.gmra.mrb[0].mxu0 %v455
        %v688 = vpop.f32.mrb[0].mxu0
        %v689 = vadd.f32 %v374, %v688
        %v690 = vpop.f32.mrb[0].mxu0
        %v691 = vadd.f32 %v378, %v690
        %692 = vmatprep.mubr.f32.mxu0 0.0
        %693 = vmatmul.mubr.f32.gmra.mrb[0].mxu0 %v458
        %v694 = vpop.f32.mrb[0].mxu0
        %v695 = vadd.f32 %v374, %v694
        %v696 = vpop.f32.mrb[0].mxu0
        %v697 = vadd.f32 %v378, %v696
        %698 = vmatprep.mubr.f32.mxu0 0.0
        %699 = vmatmul.mubr.f32.gmra.mrb[0].mxu0 %v461
        %v700 = vpop.f32.mrb[0].mxu0
        %v701 = vadd.f32 %v374, %v700
        %v702 = vpop.f32.mrb[0].mxu0
        %v703 = vadd.f32 %v378, %v702
        %704 = vmatprep.mubr.f32.mxu0 0.0
        %705 = vmatmul.mubr.f32.gmra.mrb[0].mxu0 %v464
        %v706 = vpop.f32.mrb[0].mxu0
        %v707 = vadd.f32 %v374, %v706
        %v708 = vpop.f32.mrb[0].mxu0
        %v709 = vadd.f32 %v378, %v708
        %710 = vmatprep.mubr.f32.mxu0 0.0
        %711 = vmatmul.mubr.f32.gmra.mrb[0].mxu0 %v467
        %v712 = vpop.f32.mrb[0].mxu0
        %v713 = vadd.f32 %v374, %v712
        %v714 = vpop.f32.mrb[0].mxu0
        %v715 = vadd.f32 %v378, %v714
        %716 = vmatprep.mubr.f32.mxu0 0.0
        %717 = vmatmul.mubr.f32.gmra.mrb[0].mxu0 %v470
        %v718 = vpop.f32.mrb[0].mxu0
        %v719 = vadd.f32 %v374, %v718
        %v720 = vpop.f32.mrb[0].mxu0
        %v721 = vadd.f32 %v378, %v720
        %722 = vmatprep.mubr.f32.mxu0 0.0
        %723 = vmatmul.mubr.f32.gmra.mrb[0].mxu0 %v473
        %v724 = vpop.f32.mrb[0].mxu0
        %v725 = vadd.f32 %v374, %v724
        %v726 = vpop.f32.mrb[0].mxu0
        %v727 = vadd.f32 %v378, %v726
        %728 = vmatprep.mubr.f32.mxu0 0.0
        %729 = vmatmul.mubr.f32.gmra.mrb[0].mxu0 %v476
        %v730 = vpop.f32.mrb[0].mxu0
        %v731 = vadd.f32 %v374, %v730
        %v732 = vpop.f32.mrb[0].mxu0
        %v733 = vadd.f32 %v378, %v732
        %734 = vdwg.mxu0
        %v735 = vtanh.pop %v545
        %v736 = vtanh.pop %v547
        %v737 = vtanh.pop %v551
        %v738 = vtanh.pop %v553
        %v739 = vtanh.pop %v557
        %v740 = vtanh.pop %v559
        %v741 = vtanh.pop %v563
        %v742 = vtanh.pop %v565
        %v743 = vtanh.pop %v569
        %v744 = vtanh.pop %v571
        %v745 = vtanh.pop %v575
        %v746 = vtanh.pop %v577
        %v747 = vtanh.pop %v581
        %v748 = vtanh.pop %v583
        %v749 = vtanh.pop %v587
        %v750 = vtanh.pop %v589
        %v751 = vtanh.pop %v593
        %v752 = vtanh.pop %v595
        %v753 = vtanh.pop %v599
        %v754 = vtanh.pop %v601
        %v755 = vtanh.pop %v605
        %v756 = vtanh.pop %v607
        %v757 = vtanh.pop %v611
        %v758 = vtanh.pop %v613
        %v759 = vtanh.pop %v617
        %v760 = vtanh.pop %v619
        %v761 = vtanh.pop %v623
        %v762 = vtanh.pop %v625
        %v763 = vtanh.pop %v629
        %v764 = vtanh.pop %v631
        %v765 = vtanh.pop %v635
        %v766 = vtanh.pop %v637
        %v767 = vtanh.pop %v641
        %v768 = vtanh.pop %v643
        %v769 = vtanh.pop %v647
        %v770 = vtanh.pop %v649
        %v771 = vtanh.pop %v653
        %v772 = vtanh.pop %v655
        %v773 = vtanh.pop %v659
        %v774 = vtanh.pop %v661
        %v775 = vtanh.pop %v665
        %v776 = vtanh.pop %v667
        %v777 = vtanh.pop %v671
        %v778 = vtanh.pop %v673
        %v779 = vtanh.pop %v677
        %v780 = vtanh.pop %v679
        %v781 = vtanh.pop %v683
        %v782 = vtanh.pop %v685
        %v783 = vtanh.pop %v689
        %v784 = vtanh.pop %v691
        %v785 = vtanh.pop %v695
        %v786 = vtanh.pop %v697
        %v787 = vtanh.pop %v701
        %v788 = vtanh.pop %v703
        %v789 = vtanh.pop %v707
        %v790 = vtanh.pop %v709
        %v791 = vtanh.pop %v713
        %v792 = vtanh.pop %v715
        %v793 = vtanh.pop %v719
        %v794 = vtanh.pop %v721
        %v795 = vtanh.pop %v725
        %v796 = vtanh.pop %v727
        %v797 = vtanh.pop %v731
        %v798 = vtanh.pop %v733
        %v799 = vld [vmem:[%s3] sm:$0xff]
        %v800 = vld [vmem:[%s3 + $0x8] sm:$0xff]
        %v801 = vld [vmem:[%s3 + $0x10] sm:$0xff]
        %v802 = vld [vmem:[%s3 + $0x18] sm:$0xff]
        %v803 = vld [vmem:[%s3 + $0x20] sm:$0xff]
        %v804 = vld [vmem:[%s3 + $0x28] sm:$0xff]
        %v805 = vld [vmem:[%s3 + $0x30] sm:$0xff]
        %v806 = vld [vmem:[%s3 + $0x38] sm:$0xff]
        %v807 = vld [vmem:[%s3 + $0x40] sm:$0xff]
        %v808 = vld [vmem:[%s3 + $0x48] sm:$0xff]
        %v809 = vld [vmem:[%s3 + $0x50] sm:$0xff]
        %v810 = vld [vmem:[%s3 + $0x58] sm:$0xff]
        %v811 = vld [vmem:[%s3 + $0x60] sm:$0xff]
        %v812 = vld [vmem:[%s3 + $0x68] sm:$0xff]
        %v813 = vld [vmem:[%s3 + $0x70] sm:$0xff]
        %v814 = vld [vmem:[%s3 + $0x78] sm:$0xff]
        %v815 = vld [vmem:[%s3 + $0x80] sm:$0xff]
        %v816 = vld [vmem:[%s3 + $0x88] sm:$0xff]
        %v817 = vld [vmem:[%s3 + $0x90] sm:$0xff]
        %v818 = vld [vmem:[%s3 + $0x98] sm:$0xff]
        %v819 = vld [vmem:[%s3 + $0xa0] sm:$0xff]
        %v820 = vld [vmem:[%s3 + $0xa8] sm:$0xff]
        %v821 = vld [vmem:[%s3 + $0xb0] sm:$0xff]
        %v822 = vld [vmem:[%s3 + $0xb8] sm:$0xff]
        %v823 = vld [vmem:[%s3 + $0xc0] sm:$0xff]
        %v824 = vld [vmem:[%s3 + $0xc8] sm:$0xff]
        %v825 = vld [vmem:[%s3 + $0xd0] sm:$0xff]
        %v826 = vld [vmem:[%s3 + $0xd8] sm:$0xff]
        %v827 = vld [vmem:[%s3 + $0xe0] sm:$0xff]
        %v828 = vld [vmem:[%s3 + $0xe8] sm:$0xff]
        %v829 = vld [vmem:[%s3 + $0xf0] sm:$0xff]
        %v830 = vld [vmem:[%s3 + $0xf8] sm:$0xff]
        %v831 = vld [vmem:[%s3 + $0x100] sm:$0xff]
        %v832 = vld [vmem:[%s3 + $0x108] sm:$0xff]
        %v833 = vld [vmem:[%s3 + $0x110] sm:$0xff]
        %v834 = vld [vmem:[%s3 + $0x118] sm:$0xff]
        %v835 = vld [vmem:[%s3 + $0x120] sm:$0xff]
        %v836 = vld [vmem:[%s3 + $0x128] sm:$0xff]
        %v837 = vld [vmem:[%s3 + $0x130] sm:$0xff]
        %v838 = vld [vmem:[%s3 + $0x138] sm:$0xff]
        %v839 = vld [vmem:[%s3 + $0x140] sm:$0xff]
        %v840 = vld [vmem:[%s3 + $0x148] sm:$0xff]
        %v841 = vld [vmem:[%s3 + $0x150] sm:$0xff]
        %v842 = vld [vmem:[%s3 + $0x158] sm:$0xff]
        %v843 = vld [vmem:[%s3 + $0x160] sm:$0xff]
        %v844 = vld [vmem:[%s3 + $0x168] sm:$0xff]
        %v845 = vld [vmem:[%s3 + $0x170] sm:$0xff]
        %v846 = vld [vmem:[%s3 + $0x178] sm:$0xff]
        %v847 = vld [vmem:[%s3 + $0x180] sm:$0xff]
        %v848 = vld [vmem:[%s3 + $0x188] sm:$0xff]
        %v849 = vld [vmem:[%s3 + $0x190] sm:$0xff]
        %v850 = vld [vmem:[%s3 + $0x198] sm:$0xff]
        %v851 = vld [vmem:[%s3 + $0x1a0] sm:$0xff]
        %v852 = vld [vmem:[%s3 + $0x1a8] sm:$0xff]
        %v853 = vld [vmem:[%s3 + $0x1b0] sm:$0xff]
        %v854 = vld [vmem:[%s3 + $0x1b8] sm:$0xff]
        %v855 = vld [vmem:[%s3 + $0x1c0] sm:$0xff]
        %v856 = vld [vmem:[%s3 + $0x1c8] sm:$0xff]
        %v857 = vld [vmem:[%s3 + $0x1d0] sm:$0xff]
        %v858 = vld [vmem:[%s3 + $0x1d8] sm:$0xff]
        %v859 = vld [vmem:[%s3 + $0x1e0] sm:$0xff]
        %v860 = vld [vmem:[%s3 + $0x1e8] sm:$0xff]
        %v861 = vld [vmem:[%s3 + $0x1f0] sm:$0xff]
        %v862 = vld [vmem:[%s3 + $0x1f8] sm:$0xff]
        %v863 = vld [vmem:[%s4] sm:$0x3]
        %v865 = vlaneseq
        %v866 = vshrl.u32 %v865, 7
        %v867 = vsub.s32 0, %v866
        %v868 = vrot.slane %v863, %v867
        %v869 = vlaneseq
        %v870 = vshrl.u32 %v869, 7
        %v871 = vsub.s32 1, %v870
        %v872 = vrot.slane %v863, %v871
        %875 = vmatprep.subr.mxu0 %v800
        %876 = vmatpush1.msra.mxu0 %v799
        %877 = vmatprep.subr.mxu0 %v802
        %878 = vmatpush1.msra.mxu0 %v801
        %879 = vmatprep.subr.mxu0 %v804
        %880 = vmatpush1.msra.mxu0 %v803
        %881 = vmatprep.subr.mxu0 %v806
        %882 = vmatpush1.msra.mxu0 %v805
        %883 = vmatprep.subr.mxu0 %v808
        %884 = vmatpush1.msra.mxu0 %v807
        %885 = vmatprep.subr.mxu0 %v810
        %886 = vmatpush1.msra.mxu0 %v809
        %887 = vmatprep.subr.mxu0 %v812
        %888 = vmatpush1.msra.mxu0 %v811
        %889 = vmatprep.subr.mxu0 %v814
        %890 = vmatpush1.msra.mxu0 %v813
        %891 = vmatprep.subr.mxu0 %v816
        %892 = vmatpush1.msra.mxu0 %v815
        %893 = vmatprep.subr.mxu0 %v818
        %894 = vmatpush1.msra.mxu0 %v817
        %895 = vmatprep.subr.mxu0 %v820
        %896 = vmatpush1.msra.mxu0 %v819
        %897 = vmatprep.subr.mxu0 %v822
        %898 = vmatpush1.msra.mxu0 %v821
        %899 = vmatprep.subr.mxu0 %v824
        %900 = vmatpush1.msra.mxu0 %v823
        %901 = vmatprep.subr.mxu0 %v826
        %902 = vmatpush1.msra.mxu0 %v825
        %903 = vmatprep.subr.mxu0 %v828
        %904 = vmatpush1.msra.mxu0 %v827
        %905 = vmatprep.subr.mxu0 %v830
        %906 = vmatpush1.msra.mxu0 %v829
        %907 = vmatprep.subr.mxu0 %v832
        %908 = vmatpush1.msra.mxu0 %v831
        %909 = vmatprep.subr.mxu0 %v834
        %910 = vmatpush1.msra.mxu0 %v833
        %911 = vmatprep.subr.mxu0 %v836
        %912 = vmatpush1.msra.mxu0 %v835
        %913 = vmatprep.subr.mxu0 %v838
        %914 = vmatpush1.msra.mxu0 %v837
        %915 = vmatprep.subr.mxu0 %v840
        %916 = vmatpush1.msra.mxu0 %v839
        %917 = vmatprep.subr.mxu0 %v842
        %918 = vmatpush1.msra.mxu0 %v841
        %919 = vmatprep.subr.mxu0 %v844
        %920 = vmatpush1.msra.mxu0 %v843
        %921 = vmatprep.subr.mxu0 %v846
        %922 = vmatpush1.msra.mxu0 %v845
        %923 = vmatprep.subr.mxu0 %v848
        %924 = vmatpush1.msra.mxu0 %v847
        %925 = vmatprep.subr.mxu0 %v850
        %926 = vmatpush1.msra.mxu0 %v849
        %927 = vmatprep.subr.mxu0 %v852
        %928 = vmatpush1.msra.mxu0 %v851
        %929 = vmatprep.subr.mxu0 %v854
        %930 = vmatpush1.msra.mxu0 %v853
        %931 = vmatprep.subr.mxu0 %v856
        %932 = vmatpush1.msra.mxu0 %v855
        %933 = vmatprep.subr.mxu0 %v858
        %934 = vmatpush1.msra.mxu0 %v857
        %935 = vmatprep.subr.mxu0 %v860
        %936 = vmatpush1.msra.mxu0 %v859
        %937 = vmatprep.subr.mxu0 %v862
        %938 = vmatpush1.msra.mxu0 %v861
        %939 = vmatprep.mubr.f32.mxu0 %v736
        %940 = vmatmul.mubr.f32.gmra.mrb[0].mxu0 %v735
        %v941 = vpop.f32.mrb[0].mxu0
        %v942 = vadd.f32 %v868, %v941
        %v943 = vpop.f32.mrb[0].mxu0
        %v944 = vadd.f32 %v872, %v943
        %945 = vmatprep.mubr.f32.mxu0 %v738
        %946 = vmatmul.mubr.f32.gmra.mrb[0].mxu0 %v737
        %v947 = vpop.f32.mrb[0].mxu0
        %v948 = vadd.f32 %v868, %v947
        %v949 = vpop.f32.mrb[0].mxu0
        %v950 = vadd.f32 %v872, %v949
        %951 = vmatprep.mubr.f32.mxu0 %v740
        %952 = vmatmul.mubr.f32.gmra.mrb[0].mxu0 %v739
        %v953 = vpop.f32.mrb[0].mxu0
        %v954 = vadd.f32 %v868, %v953
        %v955 = vpop.f32.mrb[0].mxu0
        %v956 = vadd.f32 %v872, %v955
        %957 = vmatprep.mubr.f32.mxu0 %v742
        %958 = vmatmul.mubr.f32.gmra.mrb[0].mxu0 %v741
        %v959 = vpop.f32.mrb[0].mxu0
        %v960 = vadd.f32 %v868, %v959
        %v961 = vpop.f32.mrb[0].mxu0
        %v962 = vadd.f32 %v872, %v961
        %963 = vmatprep.mubr.f32.mxu0 %v744
        %964 = vmatmul.mubr.f32.gmra.mrb[0].mxu0 %v743
        %v965 = vpop.f32.mrb[0].mxu0
        %v966 = vadd.f32 %v868, %v965
        %v967 = vpop.f32.mrb[0].mxu0
        %v968 = vadd.f32 %v872, %v967
        %969 = vmatprep.mubr.f32.mxu0 %v746
        %970 = vmatmul.mubr.f32.gmra.mrb[0].mxu0 %v745
        %v971 = vpop.f32.mrb[0].mxu0
        %v972 = vadd.f32 %v868, %v971
        %v973 = vpop.f32.mrb[0].mxu0
        %v974 = vadd.f32 %v872, %v973
        %975 = vmatprep.mubr.f32.mxu0 %v748
        %976 = vmatmul.mubr.f32.gmra.mrb[0].mxu0 %v747
        %v977 = vpop.f32.mrb[0].mxu0
        %v978 = vadd.f32 %v868, %v977
        %v979 = vpop.f32.mrb[0].mxu0
        %v980 = vadd.f32 %v872, %v979
        %981 = vmatprep.mubr.f32.mxu0 %v750
        %982 = vmatmul.mubr.f32.gmra.mrb[0].mxu0 %v749
        %v983 = vpop.f32.mrb[0].mxu0
        %v984 = vadd.f32 %v868, %v983
        %v985 = vpop.f32.mrb[0].mxu0
        %v986 = vadd.f32 %v872, %v985
        %987 = vmatprep.mubr.f32.mxu0 %v752
        %988 = vmatmul.mubr.f32.gmra.mrb[0].mxu0 %v751
        %v989 = vpop.f32.mrb[0].mxu0
        %v990 = vadd.f32 %v868, %v989
        %v991 = vpop.f32.mrb[0].mxu0
        %v992 = vadd.f32 %v872, %v991
        %993 = vmatprep.mubr.f32.mxu0 %v754
        %994 = vmatmul.mubr.f32.gmra.mrb[0].mxu0 %v753
        %v995 = vpop.f32.mrb[0].mxu0
        %v996 = vadd.f32 %v868, %v995
        %v997 = vpop.f32.mrb[0].mxu0
        %v998 = vadd.f32 %v872, %v997
        %999 = vmatprep.mubr.f32.mxu0 %v756
        %1000 = vmatmul.mubr.f32.gmra.mrb[0].mxu0 %v755
        %v1001 = vpop.f32.mrb[0].mxu0
        %v1002 = vadd.f32 %v868, %v1001
        %v1003 = vpop.f32.mrb[0].mxu0
        %v1004 = vadd.f32 %v872, %v1003
        %1005 = vmatprep.mubr.f32.mxu0 %v758
        %1006 = vmatmul.mubr.f32.gmra.mrb[0].mxu0 %v757
        %v1007 = vpop.f32.mrb[0].mxu0
        %v1008 = vadd.f32 %v868, %v1007
        %v1009 = vpop.f32.mrb[0].mxu0
        %v1010 = vadd.f32 %v872, %v1009
        %1011 = vmatprep.mubr.f32.mxu0 %v760
        %1012 = vmatmul.mubr.f32.gmra.mrb[0].mxu0 %v759
        %v1013 = vpop.f32.mrb[0].mxu0
        %v1014 = vadd.f32 %v868, %v1013
        %v1015 = vpop.f32.mrb[0].mxu0
        %v1016 = vadd.f32 %v872, %v1015
        %1017 = vmatprep.mubr.f32.mxu0 %v762
        %1018 = vmatmul.mubr.f32.gmra.mrb[0].mxu0 %v761
        %v1019 = vpop.f32.mrb[0].mxu0
        %v1020 = vadd.f32 %v868, %v1019
        %v1021 = vpop.f32.mrb[0].mxu0
        %v1022 = vadd.f32 %v872, %v1021
        %1023 = vmatprep.mubr.f32.mxu0 %v764
        %1024 = vmatmul.mubr.f32.gmra.mrb[0].mxu0 %v763
        %v1025 = vpop.f32.mrb[0].mxu0
        %v1026 = vadd.f32 %v868, %v1025
        %v1027 = vpop.f32.mrb[0].mxu0
        %v1028 = vadd.f32 %v872, %v1027
        %1029 = vmatprep.mubr.f32.mxu0 %v766
        %1030 = vmatmul.mubr.f32.gmra.mrb[0].mxu0 %v765
        %v1031 = vpop.f32.mrb[0].mxu0
        %v1032 = vadd.f32 %v868, %v1031
        %v1033 = vpop.f32.mrb[0].mxu0
        %v1034 = vadd.f32 %v872, %v1033
        %1035 = vmatprep.mubr.f32.mxu0 %v768
        %1036 = vmatmul.mubr.f32.gmra.mrb[0].mxu0 %v767
        %v1037 = vpop.f32.mrb[0].mxu0
        %v1038 = vadd.f32 %v868, %v1037
        %v1039 = vpop.f32.mrb[0].mxu0
        %v1040 = vadd.f32 %v872, %v1039
        %1041 = vmatprep.mubr.f32.mxu0 %v770
        %1042 = vmatmul.mubr.f32.gmra.mrb[0].mxu0 %v769
        %v1043 = vpop.f32.mrb[0].mxu0
        %v1044 = vadd.f32 %v868, %v1043
        %v1045 = vpop.f32.mrb[0].mxu0
        %v1046 = vadd.f32 %v872, %v1045
        %1047 = vmatprep.mubr.f32.mxu0 %v772
        %1048 = vmatmul.mubr.f32.gmra.mrb[0].mxu0 %v771
        %v1049 = vpop.f32.mrb[0].mxu0
        %v1050 = vadd.f32 %v868, %v1049
        %v1051 = vpop.f32.mrb[0].mxu0
        %v1052 = vadd.f32 %v872, %v1051
        %1053 = vmatprep.mubr.f32.mxu0 %v774
        %1054 = vmatmul.mubr.f32.gmra.mrb[0].mxu0 %v773
        %v1055 = vpop.f32.mrb[0].mxu0
        %v1056 = vadd.f32 %v868, %v1055
        %v1057 = vpop.f32.mrb[0].mxu0
        %v1058 = vadd.f32 %v872, %v1057
        %1059 = vmatprep.mubr.f32.mxu0 %v776
        %1060 = vmatmul.mubr.f32.gmra.mrb[0].mxu0 %v775
        %v1061 = vpop.f32.mrb[0].mxu0
        %v1062 = vadd.f32 %v868, %v1061
        %v1063 = vpop.f32.mrb[0].mxu0
        %v1064 = vadd.f32 %v872, %v1063
        %1065 = vmatprep.mubr.f32.mxu0 %v778
        %1066 = vmatmul.mubr.f32.gmra.mrb[0].mxu0 %v777
        %v1067 = vpop.f32.mrb[0].mxu0
        %v1068 = vadd.f32 %v868, %v1067
        %v1069 = vpop.f32.mrb[0].mxu0
        %v1070 = vadd.f32 %v872, %v1069
        %1071 = vmatprep.mubr.f32.mxu0 %v780
        %1072 = vmatmul.mubr.f32.gmra.mrb[0].mxu0 %v779
        %v1073 = vpop.f32.mrb[0].mxu0
        %v1074 = vadd.f32 %v868, %v1073
        %v1075 = vpop.f32.mrb[0].mxu0
        %v1076 = vadd.f32 %v872, %v1075
        %1077 = vmatprep.mubr.f32.mxu0 %v782
        %1078 = vmatmul.mubr.f32.gmra.mrb[0].mxu0 %v781
        %v1079 = vpop.f32.mrb[0].mxu0
        %v1080 = vadd.f32 %v868, %v1079
        %v1081 = vpop.f32.mrb[0].mxu0
        %v1082 = vadd.f32 %v872, %v1081
        %1083 = vmatprep.mubr.f32.mxu0 %v784
        %1084 = vmatmul.mubr.f32.gmra.mrb[0].mxu0 %v783
        %v1085 = vpop.f32.mrb[0].mxu0
        %v1086 = vadd.f32 %v868, %v1085
        %v1087 = vpop.f32.mrb[0].mxu0
        %v1088 = vadd.f32 %v872, %v1087
        %1089 = vmatprep.mubr.f32.mxu0 %v786
        %1090 = vmatmul.mubr.f32.gmra.mrb[0].mxu0 %v785
        %v1091 = vpop.f32.mrb[0].mxu0
        %v1092 = vadd.f32 %v868, %v1091
        %v1093 = vpop.f32.mrb[0].mxu0
        %v1094 = vadd.f32 %v872, %v1093
        %1095 = vmatprep.mubr.f32.mxu0 %v788
        %1096 = vmatmul.mubr.f32.gmra.mrb[0].mxu0 %v787
        %v1097 = vpop.f32.mrb[0].mxu0
        %v1098 = vadd.f32 %v868, %v1097
        %v1099 = vpop.f32.mrb[0].mxu0
        %v1100 = vadd.f32 %v872, %v1099
        %1101 = vmatprep.mubr.f32.mxu0 %v790
        %1102 = vmatmul.mubr.f32.gmra.mrb[0].mxu0 %v789
        %v1103 = vpop.f32.mrb[0].mxu0
        %v1104 = vadd.f32 %v868, %v1103
        %v1105 = vpop.f32.mrb[0].mxu0
        %v1106 = vadd.f32 %v872, %v1105
        %1107 = vmatprep.mubr.f32.mxu0 %v792
        %1108 = vmatmul.mubr.f32.gmra.mrb[0].mxu0 %v791
        %v1109 = vpop.f32.mrb[0].mxu0
        %v1110 = vadd.f32 %v868, %v1109
        %v1111 = vpop.f32.mrb[0].mxu0
        %v1112 = vadd.f32 %v872, %v1111
        %1113 = vmatprep.mubr.f32.mxu0 %v794
        %1114 = vmatmul.mubr.f32.gmra.mrb[0].mxu0 %v793
        %v1115 = vpop.f32.mrb[0].mxu0
        %v1116 = vadd.f32 %v868, %v1115
        %v1117 = vpop.f32.mrb[0].mxu0
        %v1118 = vadd.f32 %v872, %v1117
        %1119 = vmatprep.mubr.f32.mxu0 %v796
        %1120 = vmatmul.mubr.f32.gmra.mrb[0].mxu0 %v795
        %v1121 = vpop.f32.mrb[0].mxu0
        %v1122 = vadd.f32 %v868, %v1121
        %v1123 = vpop.f32.mrb[0].mxu0
        %v1124 = vadd.f32 %v872, %v1123
        %1125 = vmatprep.mubr.f32.mxu0 %v798
        %1126 = vmatmul.mubr.f32.gmra.mrb[0].mxu0 %v797
        %v1127 = vpop.f32.mrb[0].mxu0
        %v1128 = vadd.f32 %v868, %v1127
        %v1129 = vpop.f32.mrb[0].mxu0
        %v1130 = vadd.f32 %v872, %v1129
        %1131 = vdwg.mxu0
        %v1132 = vtanh.pop %v942
        %v1133 = vtanh.pop %v944
        %v1134 = vtanh.pop %v948
        %v1135 = vtanh.pop %v950
        %v1136 = vtanh.pop %v954
        %v1137 = vtanh.pop %v956
        %v1138 = vtanh.pop %v960
        %v1139 = vtanh.pop %v962
        %v1140 = vtanh.pop %v966
        %v1141 = vtanh.pop %v968
        %v1142 = vtanh.pop %v972
        %v1143 = vtanh.pop %v974
        %v1144 = vtanh.pop %v978
        %v1145 = vtanh.pop %v980
        %v1146 = vtanh.pop %v984
        %v1147 = vtanh.pop %v986
        %v1148 = vtanh.pop %v990
        %v1149 = vtanh.pop %v992
        %v1150 = vtanh.pop %v996
        %v1151 = vtanh.pop %v998
        %v1152 = vtanh.pop %v1002
        %v1153 = vtanh.pop %v1004
        %v1154 = vtanh.pop %v1008
        %v1155 = vtanh.pop %v1010
        %v1156 = vtanh.pop %v1014
        %v1157 = vtanh.pop %v1016
        %v1158 = vtanh.pop %v1020
        %v1159 = vtanh.pop %v1022
        %v1160 = vtanh.pop %v1026
        %v1161 = vtanh.pop %v1028
        %v1162 = vtanh.pop %v1032
        %v1163 = vtanh.pop %v1034
        %v1164 = vtanh.pop %v1038
        %v1165 = vtanh.pop %v1040
        %v1166 = vtanh.pop %v1044
        %v1167 = vtanh.pop %v1046
        %v1168 = vtanh.pop %v1050
        %v1169 = vtanh.pop %v1052
        %v1170 = vtanh.pop %v1056
        %v1171 = vtanh.pop %v1058
        %v1172 = vtanh.pop %v1062
        %v1173 = vtanh.pop %v1064
        %v1174 = vtanh.pop %v1068
        %v1175 = vtanh.pop %v1070
        %v1176 = vtanh.pop %v1074
        %v1177 = vtanh.pop %v1076
        %v1178 = vtanh.pop %v1080
        %v1179 = vtanh.pop %v1082
        %v1180 = vtanh.pop %v1086
        %v1181 = vtanh.pop %v1088
        %v1182 = vtanh.pop %v1092
        %v1183 = vtanh.pop %v1094
        %v1184 = vtanh.pop %v1098
        %v1185 = vtanh.pop %v1100
        %v1186 = vtanh.pop %v1104
        %v1187 = vtanh.pop %v1106
        %v1188 = vtanh.pop %v1110
        %v1189 = vtanh.pop %v1112
        %v1190 = vtanh.pop %v1116
        %v1191 = vtanh.pop %v1118
        %v1192 = vtanh.pop %v1122
        %v1193 = vtanh.pop %v1124
        %v1194 = vtanh.pop %v1128
        %v1195 = vtanh.pop %v1130
        %v1196 = vld [vmem:[%s5] sm:$0xff]
        %v1197 = vld [vmem:[%s5 + $0x8] sm:$0xff]
        %v1198 = vld [vmem:[%s5 + $0x10] sm:$0xff]
        %v1199 = vld [vmem:[%s5 + $0x18] sm:$0xff]
        %v1200 = vld [vmem:[%s5 + $0x20] sm:$0xff]
        %v1201 = vld [vmem:[%s5 + $0x28] sm:$0xff]
        %v1202 = vld [vmem:[%s5 + $0x30] sm:$0xff]
        %v1203 = vld [vmem:[%s5 + $0x38] sm:$0xff]
        %v1204 = vld [vmem:[%s5 + $0x40] sm:$0xff]
        %v1205 = vld [vmem:[%s5 + $0x48] sm:$0xff]
        %v1206 = vld [vmem:[%s5 + $0x50] sm:$0xff]
        %v1207 = vld [vmem:[%s5 + $0x58] sm:$0xff]
        %v1208 = vld [vmem:[%s5 + $0x60] sm:$0xff]
        %v1209 = vld [vmem:[%s5 + $0x68] sm:$0xff]
        %v1210 = vld [vmem:[%s5 + $0x70] sm:$0xff]
        %v1211 = vld [vmem:[%s5 + $0x78] sm:$0xff]
        %v1212 = vld [vmem:[%s5 + $0x80] sm:$0xff]
        %v1213 = vld [vmem:[%s5 + $0x88] sm:$0xff]
        %v1214 = vld [vmem:[%s5 + $0x90] sm:$0xff]
        %v1215 = vld [vmem:[%s5 + $0x98] sm:$0xff]
        %v1216 = vld [vmem:[%s5 + $0xa0] sm:$0xff]
        %v1217 = vld [vmem:[%s5 + $0xa8] sm:$0xff]
        %v1218 = vld [vmem:[%s5 + $0xb0] sm:$0xff]
        %v1219 = vld [vmem:[%s5 + $0xb8] sm:$0xff]
        %v1220 = vld [vmem:[%s5 + $0xc0] sm:$0xff]
        %v1221 = vld [vmem:[%s5 + $0xc8] sm:$0xff]
        %v1222 = vld [vmem:[%s5 + $0xd0] sm:$0xff]
        %v1223 = vld [vmem:[%s5 + $0xd8] sm:$0xff]
        %v1224 = vld [vmem:[%s5 + $0xe0] sm:$0xff]
        %v1225 = vld [vmem:[%s5 + $0xe8] sm:$0xff]
        %v1226 = vld [vmem:[%s5 + $0xf0] sm:$0xff]
        %v1227 = vld [vmem:[%s5 + $0xf8] sm:$0xff]
        %v1228 = vld [vmem:[%s5 + $0x100] sm:$0xff]
        %v1229 = vld [vmem:[%s5 + $0x108] sm:$0xff]
        %v1230 = vld [vmem:[%s5 + $0x110] sm:$0xff]
        %v1231 = vld [vmem:[%s5 + $0x118] sm:$0xff]
        %v1232 = vld [vmem:[%s5 + $0x120] sm:$0xff]
        %v1233 = vld [vmem:[%s5 + $0x128] sm:$0xff]
        %v1234 = vld [vmem:[%s5 + $0x130] sm:$0xff]
        %v1235 = vld [vmem:[%s5 + $0x138] sm:$0xff]
        %v1236 = vld [vmem:[%s5 + $0x140] sm:$0xff]
        %v1237 = vld [vmem:[%s5 + $0x148] sm:$0xff]
        %v1238 = vld [vmem:[%s5 + $0x150] sm:$0xff]
        %v1239 = vld [vmem:[%s5 + $0x158] sm:$0xff]
        %v1240 = vld [vmem:[%s5 + $0x160] sm:$0xff]
        %v1241 = vld [vmem:[%s5 + $0x168] sm:$0xff]
        %v1242 = vld [vmem:[%s5 + $0x170] sm:$0xff]
        %v1243 = vld [vmem:[%s5 + $0x178] sm:$0xff]
        %v1244 = vld [vmem:[%s5 + $0x180] sm:$0xff]
        %v1245 = vld [vmem:[%s5 + $0x188] sm:$0xff]
        %v1246 = vld [vmem:[%s5 + $0x190] sm:$0xff]
        %v1247 = vld [vmem:[%s5 + $0x198] sm:$0xff]
        %v1248 = vld [vmem:[%s5 + $0x1a0] sm:$0xff]
        %v1249 = vld [vmem:[%s5 + $0x1a8] sm:$0xff]
        %v1250 = vld [vmem:[%s5 + $0x1b0] sm:$0xff]
        %v1251 = vld [vmem:[%s5 + $0x1b8] sm:$0xff]
        %v1252 = vld [vmem:[%s5 + $0x1c0] sm:$0xff]
        %v1253 = vld [vmem:[%s5 + $0x1c8] sm:$0xff]
        %v1254 = vld [vmem:[%s5 + $0x1d0] sm:$0xff]
        %v1255 = vld [vmem:[%s5 + $0x1d8] sm:$0xff]
        %v1256 = vld [vmem:[%s5 + $0x1e0] sm:$0xff]
        %v1257 = vld [vmem:[%s5 + $0x1e8] sm:$0xff]
        %v1258 = vld [vmem:[%s5 + $0x1f0] sm:$0xff]
        %v1259 = vld [vmem:[%s5 + $0x1f8] sm:$0xff]
        %v1260 = vld [vmem:[%s6] sm:$0x3]
        %v1262 = vlaneseq
        %v1263 = vshrl.u32 %v1262, 7
        %v1264 = vsub.s32 0, %v1263
        %v1265 = vrot.slane %v1260, %v1264
        %v1266 = vlaneseq
        %v1267 = vshrl.u32 %v1266, 7
        %v1268 = vsub.s32 1, %v1267
        %v1269 = vrot.slane %v1260, %v1268
        %1272 = vmatprep.subr.mxu0 %v1197
        %1273 = vmatpush1.msra.mxu0 %v1196
        %1274 = vmatprep.subr.mxu0 %v1199
        %1275 = vmatpush1.msra.mxu0 %v1198
        %1276 = vmatprep.subr.mxu0 %v1201
        %1277 = vmatpush1.msra.mxu0 %v1200
        %1278 = vmatprep.subr.mxu0 %v1203
        %1279 = vmatpush1.msra.mxu0 %v1202
        %1280 = vmatprep.subr.mxu0 %v1205
        %1281 = vmatpush1.msra.mxu0 %v1204
        %1282 = vmatprep.subr.mxu0 %v1207
        %1283 = vmatpush1.msra.mxu0 %v1206
        %1284 = vmatprep.subr.mxu0 %v1209
        %1285 = vmatpush1.msra.mxu0 %v1208
        %1286 = vmatprep.subr.mxu0 %v1211
        %1287 = vmatpush1.msra.mxu0 %v1210
        %1288 = vmatprep.subr.mxu0 %v1213
        %1289 = vmatpush1.msra.mxu0 %v1212
        %1290 = vmatprep.subr.mxu0 %v1215
        %1291 = vmatpush1.msra.mxu0 %v1214
        %1292 = vmatprep.subr.mxu0 %v1217
        %1293 = vmatpush1.msra.mxu0 %v1216
        %1294 = vmatprep.subr.mxu0 %v1219
        %1295 = vmatpush1.msra.mxu0 %v1218
        %1296 = vmatprep.subr.mxu0 %v1221
        %1297 = vmatpush1.msra.mxu0 %v1220
        %1298 = vmatprep.subr.mxu0 %v1223
        %1299 = vmatpush1.msra.mxu0 %v1222
        %1300 = vmatprep.subr.mxu0 %v1225
        %1301 = vmatpush1.msra.mxu0 %v1224
        %1302 = vmatprep.subr.mxu0 %v1227
        %1303 = vmatpush1.msra.mxu0 %v1226
        %1304 = vmatprep.subr.mxu0 %v1229
        %1305 = vmatpush1.msra.mxu0 %v1228
        %1306 = vmatprep.subr.mxu0 %v1231
        %1307 = vmatpush1.msra.mxu0 %v1230
        %1308 = vmatprep.subr.mxu0 %v1233
        %1309 = vmatpush1.msra.mxu0 %v1232
        %1310 = vmatprep.subr.mxu0 %v1235
        %1311 = vmatpush1.msra.mxu0 %v1234
        %1312 = vmatprep.subr.mxu0 %v1237
        %1313 = vmatpush1.msra.mxu0 %v1236
        %1314 = vmatprep.subr.mxu0 %v1239
        %1315 = vmatpush1.msra.mxu0 %v1238
        %1316 = vmatprep.subr.mxu0 %v1241
        %1317 = vmatpush1.msra.mxu0 %v1240
        %1318 = vmatprep.subr.mxu0 %v1243
        %1319 = vmatpush1.msra.mxu0 %v1242
        %1320 = vmatprep.subr.mxu0 %v1245
        %1321 = vmatpush1.msra.mxu0 %v1244
        %1322 = vmatprep.subr.mxu0 %v1247
        %1323 = vmatpush1.msra.mxu0 %v1246
        %1324 = vmatprep.subr.mxu0 %v1249
        %1325 = vmatpush1.msra.mxu0 %v1248
        %1326 = vmatprep.subr.mxu0 %v1251
        %1327 = vmatpush1.msra.mxu0 %v1250
        %1328 = vmatprep.subr.mxu0 %v1253
        %1329 = vmatpush1.msra.mxu0 %v1252
        %1330 = vmatprep.subr.mxu0 %v1255
        %1331 = vmatpush1.msra.mxu0 %v1254
        %1332 = vmatprep.subr.mxu0 %v1257
        %1333 = vmatpush1.msra.mxu0 %v1256
        %1334 = vmatprep.subr.mxu0 %v1259
        %1335 = vmatpush1.msra.mxu0 %v1258
        %1336 = vmatprep.mubr.f32.mxu0 %v1133
        %1337 = vmatmul.mubr.f32.gmra.mrb[0].mxu0 %v1132
        %v1338 = vpop.f32.mrb[0].mxu0
        %v1339 = vadd.f32 %v1265, %v1338
        %v1340 = vpop.f32.mrb[0].mxu0
        %v1341 = vadd.f32 %v1269, %v1340
        %1342 = vmatprep.mubr.f32.mxu0 %v1135
        %1343 = vmatmul.mubr.f32.gmra.mrb[0].mxu0 %v1134
        %v1344 = vpop.f32.mrb[0].mxu0
        %v1345 = vadd.f32 %v1265, %v1344
        %v1346 = vpop.f32.mrb[0].mxu0
        %v1347 = vadd.f32 %v1269, %v1346
        %1348 = vmatprep.mubr.f32.mxu0 %v1137
        %1349 = vmatmul.mubr.f32.gmra.mrb[0].mxu0 %v1136
        %v1350 = vpop.f32.mrb[0].mxu0
        %v1351 = vadd.f32 %v1265, %v1350
        %v1352 = vpop.f32.mrb[0].mxu0
        %v1353 = vadd.f32 %v1269, %v1352
        %1354 = vmatprep.mubr.f32.mxu0 %v1139
        %1355 = vmatmul.mubr.f32.gmra.mrb[0].mxu0 %v1138
        %v1356 = vpop.f32.mrb[0].mxu0
        %v1357 = vadd.f32 %v1265, %v1356
        %v1358 = vpop.f32.mrb[0].mxu0
        %v1359 = vadd.f32 %v1269, %v1358
        %1360 = vmatprep.mubr.f32.mxu0 %v1141
        %1361 = vmatmul.mubr.f32.gmra.mrb[0].mxu0 %v1140
        %v1362 = vpop.f32.mrb[0].mxu0
        %v1363 = vadd.f32 %v1265, %v1362
        %v1364 = vpop.f32.mrb[0].mxu0
        %v1365 = vadd.f32 %v1269, %v1364
        %1366 = vmatprep.mubr.f32.mxu0 %v1143
        %1367 = vmatmul.mubr.f32.gmra.mrb[0].mxu0 %v1142
        %v1368 = vpop.f32.mrb[0].mxu0
        %v1369 = vadd.f32 %v1265, %v1368
        %v1370 = vpop.f32.mrb[0].mxu0
        %v1371 = vadd.f32 %v1269, %v1370
        %1372 = vmatprep.mubr.f32.mxu0 %v1145
        %1373 = vmatmul.mubr.f32.gmra.mrb[0].mxu0 %v1144
        %v1374 = vpop.f32.mrb[0].mxu0
        %v1375 = vadd.f32 %v1265, %v1374
        %v1376 = vpop.f32.mrb[0].mxu0
        %v1377 = vadd.f32 %v1269, %v1376
        %1378 = vmatprep.mubr.f32.mxu0 %v1147
        %1379 = vmatmul.mubr.f32.gmra.mrb[0].mxu0 %v1146
        %v1380 = vpop.f32.mrb[0].mxu0
        %v1381 = vadd.f32 %v1265, %v1380
        %v1382 = vpop.f32.mrb[0].mxu0
        %v1383 = vadd.f32 %v1269, %v1382
        %1384 = vmatprep.mubr.f32.mxu0 %v1149
        %1385 = vmatmul.mubr.f32.gmra.mrb[0].mxu0 %v1148
        %v1386 = vpop.f32.mrb[0].mxu0
        %v1387 = vadd.f32 %v1265, %v1386
        %v1388 = vpop.f32.mrb[0].mxu0
        %v1389 = vadd.f32 %v1269, %v1388
        %1390 = vmatprep.mubr.f32.mxu0 %v1151
        %1391 = vmatmul.mubr.f32.gmra.mrb[0].mxu0 %v1150
        %v1392 = vpop.f32.mrb[0].mxu0
        %v1393 = vadd.f32 %v1265, %v1392
        %v1394 = vpop.f32.mrb[0].mxu0
        %v1395 = vadd.f32 %v1269, %v1394
        %1396 = vmatprep.mubr.f32.mxu0 %v1153
        %1397 = vmatmul.mubr.f32.gmra.mrb[0].mxu0 %v1152
        %v1398 = vpop.f32.mrb[0].mxu0
        %v1399 = vadd.f32 %v1265, %v1398
        %v1400 = vpop.f32.mrb[0].mxu0
        %v1401 = vadd.f32 %v1269, %v1400
        %1402 = vmatprep.mubr.f32.mxu0 %v1155
        %1403 = vmatmul.mubr.f32.gmra.mrb[0].mxu0 %v1154
        %v1404 = vpop.f32.mrb[0].mxu0
        %v1405 = vadd.f32 %v1265, %v1404
        %v1406 = vpop.f32.mrb[0].mxu0
        %v1407 = vadd.f32 %v1269, %v1406
        %1408 = vmatprep.mubr.f32.mxu0 %v1157
        %1409 = vmatmul.mubr.f32.gmra.mrb[0].mxu0 %v1156
        %v1410 = vpop.f32.mrb[0].mxu0
        %v1411 = vadd.f32 %v1265, %v1410
        %v1412 = vpop.f32.mrb[0].mxu0
        %v1413 = vadd.f32 %v1269, %v1412
        %1414 = vmatprep.mubr.f32.mxu0 %v1159
        %1415 = vmatmul.mubr.f32.gmra.mrb[0].mxu0 %v1158
        %v1416 = vpop.f32.mrb[0].mxu0
        %v1417 = vadd.f32 %v1265, %v1416
        %v1418 = vpop.f32.mrb[0].mxu0
        %v1419 = vadd.f32 %v1269, %v1418
        %1420 = vmatprep.mubr.f32.mxu0 %v1161
        %1421 = vmatmul.mubr.f32.gmra.mrb[0].mxu0 %v1160
        %v1422 = vpop.f32.mrb[0].mxu0
        %v1423 = vadd.f32 %v1265, %v1422
        %v1424 = vpop.f32.mrb[0].mxu0
        %v1425 = vadd.f32 %v1269, %v1424
        %1426 = vmatprep.mubr.f32.mxu0 %v1163
        %1427 = vmatmul.mubr.f32.gmra.mrb[0].mxu0 %v1162
        %v1428 = vpop.f32.mrb[0].mxu0
        %v1429 = vadd.f32 %v1265, %v1428
        %v1430 = vpop.f32.mrb[0].mxu0
        %v1431 = vadd.f32 %v1269, %v1430
        %1432 = vmatprep.mubr.f32.mxu0 %v1165
        %1433 = vmatmul.mubr.f32.gmra.mrb[0].mxu0 %v1164
        %v1434 = vpop.f32.mrb[0].mxu0
        %v1435 = vadd.f32 %v1265, %v1434
        %v1436 = vpop.f32.mrb[0].mxu0
        %v1437 = vadd.f32 %v1269, %v1436
        %1438 = vmatprep.mubr.f32.mxu0 %v1167
        %1439 = vmatmul.mubr.f32.gmra.mrb[0].mxu0 %v1166
        %v1440 = vpop.f32.mrb[0].mxu0
        %v1441 = vadd.f32 %v1265, %v1440
        %v1442 = vpop.f32.mrb[0].mxu0
        %v1443 = vadd.f32 %v1269, %v1442
        %1444 = vmatprep.mubr.f32.mxu0 %v1169
        %1445 = vmatmul.mubr.f32.gmra.mrb[0].mxu0 %v1168
        %v1446 = vpop.f32.mrb[0].mxu0
        %v1447 = vadd.f32 %v1265, %v1446
        %v1448 = vpop.f32.mrb[0].mxu0
        %v1449 = vadd.f32 %v1269, %v1448
        %1450 = vmatprep.mubr.f32.mxu0 %v1171
        %1451 = vmatmul.mubr.f32.gmra.mrb[0].mxu0 %v1170
        %v1452 = vpop.f32.mrb[0].mxu0
        %v1453 = vadd.f32 %v1265, %v1452
        %v1454 = vpop.f32.mrb[0].mxu0
        %v1455 = vadd.f32 %v1269, %v1454
        %1456 = vmatprep.mubr.f32.mxu0 %v1173
        %1457 = vmatmul.mubr.f32.gmra.mrb[0].mxu0 %v1172
        %v1458 = vpop.f32.mrb[0].mxu0
        %v1459 = vadd.f32 %v1265, %v1458
        %v1460 = vpop.f32.mrb[0].mxu0
        %v1461 = vadd.f32 %v1269, %v1460
        %1462 = vmatprep.mubr.f32.mxu0 %v1175
        %1463 = vmatmul.mubr.f32.gmra.mrb[0].mxu0 %v1174
        %v1464 = vpop.f32.mrb[0].mxu0
        %v1465 = vadd.f32 %v1265, %v1464
        %v1466 = vpop.f32.mrb[0].mxu0
        %v1467 = vadd.f32 %v1269, %v1466
        %1468 = vmatprep.mubr.f32.mxu0 %v1177
        %1469 = vmatmul.mubr.f32.gmra.mrb[0].mxu0 %v1176
        %v1470 = vpop.f32.mrb[0].mxu0
        %v1471 = vadd.f32 %v1265, %v1470
        %v1472 = vpop.f32.mrb[0].mxu0
        %v1473 = vadd.f32 %v1269, %v1472
        %1474 = vmatprep.mubr.f32.mxu0 %v1179
        %1475 = vmatmul.mubr.f32.gmra.mrb[0].mxu0 %v1178
        %v1476 = vpop.f32.mrb[0].mxu0
        %v1477 = vadd.f32 %v1265, %v1476
        %v1478 = vpop.f32.mrb[0].mxu0
        %v1479 = vadd.f32 %v1269, %v1478
        %1480 = vmatprep.mubr.f32.mxu0 %v1181
        %1481 = vmatmul.mubr.f32.gmra.mrb[0].mxu0 %v1180
        %v1482 = vpop.f32.mrb[0].mxu0
        %v1483 = vadd.f32 %v1265, %v1482
        %v1484 = vpop.f32.mrb[0].mxu0
        %v1485 = vadd.f32 %v1269, %v1484
        %1486 = vmatprep.mubr.f32.mxu0 %v1183
        %1487 = vmatmul.mubr.f32.gmra.mrb[0].mxu0 %v1182
        %v1488 = vpop.f32.mrb[0].mxu0
        %v1489 = vadd.f32 %v1265, %v1488
        %v1490 = vpop.f32.mrb[0].mxu0
        %v1491 = vadd.f32 %v1269, %v1490
        %1492 = vmatprep.mubr.f32.mxu0 %v1185
        %1493 = vmatmul.mubr.f32.gmra.mrb[0].mxu0 %v1184
        %v1494 = vpop.f32.mrb[0].mxu0
        %v1495 = vadd.f32 %v1265, %v1494
        %v1496 = vpop.f32.mrb[0].mxu0
        %v1497 = vadd.f32 %v1269, %v1496
        %1498 = vmatprep.mubr.f32.mxu0 %v1187
        %1499 = vmatmul.mubr.f32.gmra.mrb[0].mxu0 %v1186
        %v1500 = vpop.f32.mrb[0].mxu0
        %v1501 = vadd.f32 %v1265, %v1500
        %v1502 = vpop.f32.mrb[0].mxu0
        %v1503 = vadd.f32 %v1269, %v1502
        %1504 = vmatprep.mubr.f32.mxu0 %v1189
        %1505 = vmatmul.mubr.f32.gmra.mrb[0].mxu0 %v1188
        %v1506 = vpop.f32.mrb[0].mxu0
        %v1507 = vadd.f32 %v1265, %v1506
        %v1508 = vpop.f32.mrb[0].mxu0
        %v1509 = vadd.f32 %v1269, %v1508
        %1510 = vmatprep.mubr.f32.mxu0 %v1191
        %1511 = vmatmul.mubr.f32.gmra.mrb[0].mxu0 %v1190
        %v1512 = vpop.f32.mrb[0].mxu0
        %v1513 = vadd.f32 %v1265, %v1512
        %v1514 = vpop.f32.mrb[0].mxu0
        %v1515 = vadd.f32 %v1269, %v1514
        %1516 = vmatprep.mubr.f32.mxu0 %v1193
        %1517 = vmatmul.mubr.f32.gmra.mrb[0].mxu0 %v1192
        %v1518 = vpop.f32.mrb[0].mxu0
        %v1519 = vadd.f32 %v1265, %v1518
        %v1520 = vpop.f32.mrb[0].mxu0
        %v1521 = vadd.f32 %v1269, %v1520
        %1522 = vmatprep.mubr.f32.mxu0 %v1195
        %1523 = vmatmul.mubr.f32.gmra.mrb[0].mxu0 %v1194
        %v1524 = vpop.f32.mrb[0].mxu0
        %v1525 = vadd.f32 %v1265, %v1524
        %v1526 = vpop.f32.mrb[0].mxu0
        %v1527 = vadd.f32 %v1269, %v1526
        %1528 = vdwg.mxu0
        %v1529 = vtanh.pop %v1339
        %v1530 = vtanh.pop %v1341
        %v1531 = vtanh.pop %v1345
        %v1532 = vtanh.pop %v1347
        %v1533 = vtanh.pop %v1351
        %v1534 = vtanh.pop %v1353
        %v1535 = vtanh.pop %v1357
        %v1536 = vtanh.pop %v1359
        %v1537 = vtanh.pop %v1363
        %v1538 = vtanh.pop %v1365
        %v1539 = vtanh.pop %v1369
        %v1540 = vtanh.pop %v1371
        %v1541 = vtanh.pop %v1375
        %v1542 = vtanh.pop %v1377
        %v1543 = vtanh.pop %v1381
        %v1544 = vtanh.pop %v1383
        %v1545 = vtanh.pop %v1387
        %v1546 = vtanh.pop %v1389
        %v1547 = vtanh.pop %v1393
        %v1548 = vtanh.pop %v1395
        %v1549 = vtanh.pop %v1399
        %v1550 = vtanh.pop %v1401
        %v1551 = vtanh.pop %v1405
        %v1552 = vtanh.pop %v1407
        %v1553 = vtanh.pop %v1411
        %v1554 = vtanh.pop %v1413
        %v1555 = vtanh.pop %v1417
        %v1556 = vtanh.pop %v1419
        %v1557 = vtanh.pop %v1423
        %v1558 = vtanh.pop %v1425
        %v1559 = vtanh.pop %v1429
        %v1560 = vtanh.pop %v1431
        %v1561 = vtanh.pop %v1435
        %v1562 = vtanh.pop %v1437
        %v1563 = vtanh.pop %v1441
        %v1564 = vtanh.pop %v1443
        %v1565 = vtanh.pop %v1447
        %v1566 = vtanh.pop %v1449
        %v1567 = vtanh.pop %v1453
        %v1568 = vtanh.pop %v1455
        %v1569 = vtanh.pop %v1459
        %v1570 = vtanh.pop %v1461
        %v1571 = vtanh.pop %v1465
        %v1572 = vtanh.pop %v1467
        %v1573 = vtanh.pop %v1471
        %v1574 = vtanh.pop %v1473
        %v1575 = vtanh.pop %v1477
        %v1576 = vtanh.pop %v1479
        %v1577 = vtanh.pop %v1483
        %v1578 = vtanh.pop %v1485
        %v1579 = vtanh.pop %v1489
        %v1580 = vtanh.pop %v1491
        %v1581 = vtanh.pop %v1495
        %v1582 = vtanh.pop %v1497
        %v1583 = vtanh.pop %v1501
        %v1584 = vtanh.pop %v1503
        %v1585 = vtanh.pop %v1507
        %v1586 = vtanh.pop %v1509
        %v1587 = vtanh.pop %v1513
        %v1588 = vtanh.pop %v1515
        %v1589 = vtanh.pop %v1519
        %v1590 = vtanh.pop %v1521
        %v1591 = vtanh.pop %v1525
        %v1592 = vtanh.pop %v1527
        %v1593 = vld [vmem:[%s7] sm:$0x3]
        %v1594 = vld [vmem:[#allocation2] sm:$0x1]
        %1596 = vset.pattern.permute.xlu0 0
        %1597 = vperm.xlu0 %1596, %v1594
        %v1598 = vpop.permute.xlu0 %1597
        %v1600 = vlaneseq
        %v1601 = vshrl.u32 %v1600, 7
        %v1602 = vsub.s32 0, %v1601
        %v1603 = vrot.slane %v1598, %v1602
        %v1605 = vlaneseq
        %v1606 = vshrl.u32 %v1605, 7
        %v1607 = vsub.s32 0, %v1606
        %v1608 = vrot.slane %v1593, %v1607
        %v1609 = vlaneseq
        %v1610 = vshrl.u32 %v1609, 7
        %v1611 = vsub.s32 1, %v1610
        %v1612 = vrot.slane %v1593, %v1611
        %1615 = vmatprep.subr.mxu0 %v1530
        %1616 = vmatpush1.xpose.msra.mxu0 %v1529
        %1617 = vmatprep.subr.mxu0 %v1532
        %1618 = vmatpush1.xpose.msra.mxu0 %v1531
        %1619 = vmatprep.subr.mxu0 %v1534
        %1620 = vmatpush1.xpose.msra.mxu0 %v1533
        %1621 = vmatprep.subr.mxu0 %v1536
        %1622 = vmatpush1.xpose.msra.mxu0 %v1535
        %1623 = vmatprep.subr.mxu0 %v1538
        %1624 = vmatpush1.xpose.msra.mxu0 %v1537
        %1625 = vmatprep.subr.mxu0 %v1540
        %1626 = vmatpush1.xpose.msra.mxu0 %v1539
        %1627 = vmatprep.subr.mxu0 %v1542
        %1628 = vmatpush1.xpose.msra.mxu0 %v1541
        %1629 = vmatprep.subr.mxu0 %v1544
        %1630 = vmatpush1.xpose.msra.mxu0 %v1543
        %1631 = vmatprep.subr.mxu0 %v1546
        %1632 = vmatpush1.xpose.msra.mxu0 %v1545
        %1633 = vmatprep.subr.mxu0 %v1548
        %1634 = vmatpush1.xpose.msra.mxu0 %v1547
        %1635 = vmatprep.subr.mxu0 %v1550
        %1636 = vmatpush1.xpose.msra.mxu0 %v1549
        %1637 = vmatprep.subr.mxu0 %v1552
        %1638 = vmatpush1.xpose.msra.mxu0 %v1551
        %1639 = vmatprep.subr.mxu0 %v1554
        %1640 = vmatpush1.xpose.msra.mxu0 %v1553
        %1641 = vmatprep.subr.mxu0 %v1556
        %1642 = vmatpush1.xpose.msra.mxu0 %v1555
        %1643 = vmatprep.subr.mxu0 %v1558
        %1644 = vmatpush1.xpose.msra.mxu0 %v1557
        %1645 = vmatprep.subr.mxu0 %v1560
        %1646 = vmatpush1.xpose.msra.mxu0 %v1559
        %1647 = vmatprep.subr.mxu0 %v1562
        %1648 = vmatpush1.xpose.msra.mxu0 %v1561
        %1649 = vmatprep.subr.mxu0 %v1564
        %1650 = vmatpush1.xpose.msra.mxu0 %v1563
        %1651 = vmatprep.subr.mxu0 %v1566
        %1652 = vmatpush1.xpose.msra.mxu0 %v1565
        %1653 = vmatprep.subr.mxu0 %v1568
        %1654 = vmatpush1.xpose.msra.mxu0 %v1567
        %1655 = vmatprep.subr.mxu0 %v1570
        %1656 = vmatpush1.xpose.msra.mxu0 %v1569
        %1657 = vmatprep.subr.mxu0 %v1572
        %1658 = vmatpush1.xpose.msra.mxu0 %v1571
        %1659 = vmatprep.subr.mxu0 %v1574
        %1660 = vmatpush1.xpose.msra.mxu0 %v1573
        %1661 = vmatprep.subr.mxu0 %v1576
        %1662 = vmatpush1.xpose.msra.mxu0 %v1575
        %1663 = vmatprep.subr.mxu0 %v1578
        %1664 = vmatpush1.xpose.msra.mxu0 %v1577
        %1665 = vmatprep.subr.mxu0 %v1580
        %1666 = vmatpush1.xpose.msra.mxu0 %v1579
        %1667 = vmatprep.subr.mxu0 %v1582
        %1668 = vmatpush1.xpose.msra.mxu0 %v1581
        %1669 = vmatprep.subr.mxu0 %v1584
        %1670 = vmatpush1.xpose.msra.mxu0 %v1583
        %1671 = vmatprep.subr.mxu0 %v1586
        %1672 = vmatpush1.xpose.msra.mxu0 %v1585
        %1673 = vmatprep.subr.mxu0 %v1588
        %1674 = vmatpush1.xpose.msra.mxu0 %v1587
        %1675 = vmatprep.subr.mxu0 %v1590
        %1676 = vmatpush1.xpose.msra.mxu0 %v1589
        %1677 = vmatprep.subr.mxu0 %v1592
        %1678 = vmatpush1.xpose.msra.mxu0 %v1591
        %1679 = vmatprep.mubr.f32.mxu0 %v1612
        %1680 = vmatmul.mubr.f32.gmra.mrb[0].mxu0 %v1608
        %v1681 = vpop.f32.mrb[0].mxu0
        %v1682 = vadd.f32 %v1603, %v1681
        %v1683 = vpop.f32.mrb[0].mxu0
        %v1684 = vadd.f32 %v1603, %v1683
        %1685 = vdwg.mxu0
        %v1686 = vxor.u32 %v1682, 2147483648
        %v1687 = vxor.u32 %v1684, 2147483648
        %v1688 = vmul.f32 %v1686, 1.442695
        %v1689 = vpow.pop %v1688
        %v1690 = vmul.f32 %v1687, 1.442695
        %v1691 = vpow.pop %v1690
        %v1692 = vadd.f32 %v1689, 1.0
        %v1693 = vadd.f32 %v1691, 1.0
        %v1694 = vrcp.pop %v1692
        %v1695 = vmul.f32 1.0, %v1694
        %v1696 = vrcp.pop %v1693
        %v1697 = vmul.f32 1.0, %v1696
        %v1700 = vcombine.low %v1695, %v1697
        %v1702 = vunpack.c.l.s4 1966171168
        %v1703 = vunpack.c.0.s8 %v1702
        %v1704 = vlaneseq
        %v1705 = vshrl.u32 %v1704, 7
        %v1706 = vsub.s32 %v1703, %v1705
        %v1707 = vrot.slane %v1700, %v1706
        %v1709 = vunpack.c.l.s4 1966171168
        %v1710 = vunpack.c.0.s8 %v1709
        %v1711 = vlaneseq
        %v1712 = vshrl.u32 %v1711, 7
        %v1713 = vsub.s32 %v1710, %v1712
        %v1714 = vrot.slane %v1707, %v1713
        %v1716 = vlaneseq
        %vm1717 = vcmp.ge.s32.totalorder %v1716, 0
        %vm1718 = vcmp.lt.s32.totalorder %v1716, 256
        %vm1719 = vmand %vm1717, %vm1718
        %1720 = vst.msk [vmem:[%s328] sm:$0x3] %vm1719, %v1714
        %s1721 = sand.u32 %s227, 1
        %s1722 = scalar_lea.sflag [#allocation4], %s1721
        %s1723 = sand.u32 %s227, 1
        %s1724 = smul.addr %s1723, 2
        %s1725 = scalar_lea.vmem [#allocation3], %s1724
        // Predicated region
        $region57: #{_lunar_forward_impl.1} parent=55 // pred_check
          %p1726 = pneg %p237
        $region58: #{_lunar_forward_impl.1} parent=55 // pred_check_branch
          %1728 = sbr.rel (%p1726) target = $region60
        $region59: #{_lunar_forward_impl.1} parent=55 // pred_region
          %s1730 = ssub.s32 32, 32
          %1731 = vsyncadd %s1722, %s1730
          %s1732 = smul.addr %s25, 2
          %s1733 = smul.addr %s1732, 16
          %s1734 = scalar_lea.hbm %s9, %s1733
          %s1736 = sshll.u32 %s1725, 4
          %s1737 = int_to_ptr.vmem [resolvable:$true] %s1736
          %1739 = dma.vmem_to_hbm [thread:$0]  %s1737, 32, %s1734, %s1722
        $region60: #{_lunar_forward_impl.1} parent=55 // pred_fallthru
          _
      $region56: #{_lunar_forward_impl.1} parent=5 // pred_fallthru
        _
      %p1740 = scmp.le.s32.totalorder 2, %s20
      // Predicated region
      $region61: #{_lunar_forward_impl.1} parent=5 // pred_check
        %p1741 = pneg %p1740
      $region62: #{_lunar_forward_impl.1} parent=5 // pred_check_branch
        %1743 = sbr.rel (%p1741) target = $region64
      $region63: #{_lunar_forward_impl.1} parent=5 // pred_region
        %s1744 = ssub.s32 %s20, 2
        // Predicated region
        $region65: #{_lunar_forward_impl.1} parent=63 // pred_check
          %p1745 = pneg %p243
        $region66: #{_lunar_forward_impl.1} parent=63 // pred_check_branch
          %1747 = sbr.rel (%p1745) target = $region68
        $region67: #{_lunar_forward_impl.1} parent=63 // pred_region
          %s1748 = sand.u32 %s228, 1
          %s1749 = scalar_lea.sflag [#allocation4], %s1748
          %s1750 = sand.u32 %s228, 1
          %s1751 = smul.addr %s1750, 2
          %s1752 = scalar_lea.vmem [#allocation3], %s1751
          %1753 = dma.done %s1749, 32
        $region68: #{_lunar_forward_impl.1} parent=63 // pred_fallthru
          _
      $region64: #{_lunar_forward_impl.1} parent=5 // pred_fallthru
        _
    $region6: #{_lunar_forward_impl.1} parent=1 // loop_footer
      %s24 = sadd.s32 1, %s20
    $region7: #{_lunar_forward_impl.1} parent=1 // loop_footer_branch
      %19 = sbr.rel target = $region3
    $region8: #{_lunar_forward_impl.1} parent=1 // loop_exit
      _
    %1754 = vsyncpa [#allocation4], 1
    %s1755 = scalar_lea.sflag [#allocation4], 1
    %1756 = vsyncpa %s1755, 1

</llo_original>
